<compile_context>
chip_gen: v7x
topology: tpu7x:2x2x1
jax: 0.10.0
libtpu: 0.0.40
codegen_flags: <defaults>
</compile_context>

<pallas_src>
import functools

import jax
import jax.numpy as jnp
from jax.experimental import pallas as pl
from jax.experimental.pallas import tpu as pltpu


# ------------------------------ fused kernel ---------------------------------

def _selfsup_fused_kernel(
    # inputs
    img_a_ref,      # (1, C_img, HWT)
    img_b_ref,      # (1, C_img, HWT)
    w_all_ref,      # (C_feat + K, C_img)  rows [0:C_feat]=encoder, [C_feat:]=keypointer
    b_all_ref,      # (C_feat + K, 1)
    dec_w_ref,      # (C_img, C_feat)
    dec_b_ref,      # (C_img, 1)
    # outputs
    recon_b_ref,    # (1, C_img, HWT)  reconstruct_image_b
    recon_fg_ref,   # (1, C_img, HWT)  reconstruct_image_b_foreground
    heat_b_ref,     # (1, K, HWT)      keypoints_b_heatmaps
    maps_a_ref,     # (1, K, HWT)      image_a_keypoints_maps
    *extra_refs,    # (fg_b_ref, bg_a_ref) only when num_keypoints == 1
    num_keypoints,
    num_feat,
):
    img_a = img_a_ref[0]            # (C_img, HWT)
    img_b = img_b_ref[0]
    w_all = w_all_ref[...]
    b_all = b_all_ref[...]
    dec_w = dec_w_ref[...]
    dec_b = dec_b_ref[...]

    def head(img):
        # One fused encoder+keypointer 1x1 conv: (C_feat+K, C_img) @ (C_img, HWT)
        y = jnp.dot(w_all, img, preferred_element_type=jnp.float32) + b_all
        feat = jnp.maximum(y[:num_feat], 0.0)      # encoder: ReLU
        logits = y[num_feat:]                      # keypointer logits (heatmaps)
        return feat, logits

    feat_a, _logits_a_unused = head(img_a)
    feat_b, logits_b = head(img_b)
    # Recompute logits_a from the same fused dot output:
    _, logits_a = head(img_a) if False else (None, None)  # (kept fused below)
    # NOTE: logits_a comes from the same dot as feat_a; re-slice instead of re-dot.
    logits_a = _logits_a_unused
    maps_a = jax.nn.sigmoid(logits_a)              # (K, HWT)
    maps_b = jax.nn.sigmoid(logits_b)

    # .detach() on image_a_feat / maps_a is a forward no-op.
    # Keypoint transport, refactored to prefix-product per-pixel weights:
    #   t_K = (prod_k wbg_k) * feat_a + (sum_k mb_k * prod_{j>k} wbg_j) * feat_b
    # (algebraically identical to the reference K-step recurrence).
    K = num_keypoints
    w_bg = (1.0 - maps_a) * (1.0 - maps_b)         # (K, HWT)
    s_fg = maps_b[K - 1:K, :]                      # (1, HWT)
    w_tot = w_bg[K - 1:K, :]                       # (1, HWT)
    for k in range(K - 2, -1, -1):
        s_fg = s_fg + maps_b[k:k + 1, :] * w_tot
        w_tot = w_tot * w_bg[k:k + 1, :]
    transported = w_tot * feat_a + s_fg * feat_b   # single pass over (C_feat, HWT)
    # PyTorch reference keeps only the last keypoint's foreground.
    foreground = maps_b[K - 1:K, :] * feat_b

    # Fused decoder 1x1 convs (transported / foreground never hit HBM).
    recon_b_ref[0] = jnp.dot(dec_w, transported,
                             preferred_element_type=jnp.float32) + dec_b
    recon_fg_ref[0] = jnp.dot(dec_w, foreground,
                              preferred_element_type=jnp.float32) + dec_b
    heat_b_ref[0] = logits_b
    maps_a_ref[0] = maps_a

    if K == 1:
        fg_b_ref, bg_a_ref = extra_refs
        fg_b_ref[0] = feat_b * maps_b[0:1, :]               # image_b_foreground
        bg_a_ref[0] = feat_a * (1.0 - maps_a[0:1, :])       # image_a_background


# --------------------------- sizing helpers -----------------------------------

def _vmem_limit_bytes():
    """Per-generation scoped-VMEM budget: ~3/4 of physical, capped at 96 MiB."""
    cap = 128 * 1024 * 1024
    try:
        info = pltpu.get_tpu_info()
        cap = int(getattr(info, "vmem_capacity_bytes", cap))
    except Exception:
        pass
    # 128 MiB parts (v5e/v6e) -> 96 MiB; 64 MiB parts (v7x) -> 48 MiB.
    return int(min(96 * 1024 * 1024, (cap * 3) // 4))


def _pick_hw_tile(hw, c_img, c_feat, k, vmem_budget):
    """Largest 128-multiple HW tile (dividing hw) whose footprint fits the budget."""
    # Rough f32 columns per HW element: 2x-buffered I/O + live intermediates.
    cols = (2 * c_img * 2                                             # img_a/img_b in
            + (2 * c_img + 2 * k + (2 * c_feat if k == 1 else 0)) * 2  # outputs
            + 2 * (c_feat + k) + 2 * c_feat + 4 * k + c_feat)          # temps
    target = vmem_budget // (2 * 4 * cols)     # keep ~2x headroom
    if target >= hw or hw <= 128:
        return hw
    t = max(128, (min(target, hw) // 128) * 128)
    for cand in range(t, 127, -128):
        if hw % cand == 0:
            return cand
    return hw


# ------------------------------ forward wrapper -------------------------------

def self_sup_attention_forward(params, image_a_nchw, image_b_nchw, hw_tile=None):
    """SelfSupAttention.forward with default flags; returns the `meta` dict (NCHW)."""
    n, c_img, h, w = image_a_nchw.shape
    hw = h * w
    c_feat = params['enc_w'].shape[0]
    k = params['kpt_w'].shape[0]

    # NCHW -> (N, C, H*W): pure reshape (HW on lanes, lane-dense).
    image_a = image_a_nchw.reshape(n, c_img, hw).astype(jnp.float32)
    image_b = image_b_nchw.reshape(n, c_img, hw).astype(jnp.float32)

    # Encoder + keypointer share one fused 1x1-conv weight (single dot per image).
    w_all = jnp.concatenate([params['enc_w'], params['kpt_w']], axis=0).astype(jnp.float32)
    b_all = jnp.concatenate([params['enc_b'], params['kpt_b']], axis=0).astype(jnp.float32)
    dec_w = params['dec_w'].astype(jnp.float32)
    dec_b = params['dec_b'].astype(jnp.float32)

    vmem_budget = _vmem_limit_bytes()
    if hw_tile is None:
        hw_tile = _pick_hw_tile(hw, c_img, c_feat, k, vmem_budget)
    num_hw_tiles = hw // hw_tile

    def resident(shape):
        nd = len(shape)
        return pl.BlockSpec(shape, lambda i, j, _nd=nd: (0,) * _nd)

    img_spec = pl.BlockSpec((1, c_img, hw_tile), lambda i, j: (i, 0, j))
    kmap_spec = pl.BlockSpec((1, k, hw_tile), lambda i, j: (i, 0, j))

    out_shapes = [
        jax.ShapeDtypeStruct((n, c_img, hw), jnp.float32),   # reconstruct_image_b
        jax.ShapeDtypeStruct((n, c_img, hw), jnp.float32),   # reconstruct_image_b_foreground
        jax.ShapeDtypeStruct((n, k, hw), jnp.float32),       # keypoints_b_heatmaps
        jax.ShapeDtypeStruct((n, k, hw), jnp.float32),       # image_a_keypoints_maps
    ]
    out_specs = [img_spec, img_spec, kmap_spec, kmap_spec]
    if k == 1:
        feat_spec = pl.BlockSpec((1, c_feat, hw_tile), lambda i, j: (i, 0, j))
        out_shapes += [jax.ShapeDtypeStruct((n, c_feat, hw), jnp.float32)] * 2
        out_specs += [feat_spec, feat_spec]

    outs = pl.pallas_call(
        functools.partial(_selfsup_fused_kernel, num_keypoints=k, num_feat=c_feat),
        grid=(n, num_hw_tiles),
        in_specs=[
            img_spec, img_spec,
            resident((c_feat + k, c_img)), resident((c_feat + k, 1)),
            resident((c_img, c_feat)), resident((c_img, 1)),
        ],
        out_specs=out_specs,
        out_shape=out_shapes,
        compiler_params=pltpu.CompilerParams(
            dimension_semantics=("parallel", "parallel"),
            vmem_limit_bytes=vmem_budget,
        ),
    )(image_a, image_b, w_all, b_all, dec_w, dec_b)

    recon_b, recon_fg, heat_b, maps_a = outs[0], outs[1], outs[2], outs[3]

    def to_nchw(x):                                          # (N, C, H*W) -> (N, C, H, W)
        return x.reshape(n, x.shape[1], h, w)

    meta = {}
    if k == 1:
        meta['image_b_foreground'] = to_nchw(outs[4])
        meta['image_a_background'] = to_nchw(outs[5])
    meta['reconstruct_image_b_foreground'] = to_nchw(recon_fg)
    # TODO(synk): output_keypoints_loc branch (GaussianLayer smoothing + HeatmapParser
    # maxpool-NMS / top-k) only runs for non-default flags with K == 1; not implemented.
    meta['keypoints_b_heatmaps'] = to_nchw(heat_b)
    meta['image_a_keypoints_maps'] = to_nchw(maps_a)
    meta['reconstruct_image_b'] = to_nchw(recon_b)
    return meta


# --------------------------- pure-JAX reference -------------------------------

def _reference_forward(params, image_a_nchw, image_b_nchw):
    """Direct transliteration of SelfSupAttention.forward (default flags)."""
    hp = jax.lax.Precision.HIGHEST
    n, c_img, h, w = image_a_nchw.shape
    hw = h * w
    a = image_a_nchw.reshape(n, c_img, hw)
    b = image_b_nchw.reshape(n, c_img, hw)
    enc = lambda x: jnp.maximum(
        jnp.einsum('fc,nch->nfh', params['enc_w'], x, precision=hp) + params['enc_b'][None], 0.0)
    kpt = lambda x: jnp.einsum('kc,nch->nkh', params['kpt_w'], x, precision=hp) + params['kpt_b'][None]
    dec = lambda x: jnp.einsum('cf,nfh->nch', params['dec_w'], x, precision=hp) + params['dec_b'][None]

    feat_a, feat_b = enc(a), enc(b)
    logits_a, logits_b = kpt(a), kpt(b)
    maps_a, maps_b = jax.nn.sigmoid(logits_a), jax.nn.sigmoid(logits_b)
    k = maps_a.shape[1]

    transported = feat_a
    for i in range(k):
        ma = maps_a[:, i:i + 1]
        mb = maps_b[:, i:i + 1]
        transported = (1 - ma) * (1 - mb) * transported + mb * feat_b
        foreground = feat_b * mb

    meta = {}
    if k == 1:
        meta['image_b_foreground'] = (feat_b * maps_b[:, 0:1]).reshape(n, -1, h, w)
        meta['image_a_background'] = (feat_a * (1 - maps_a[:, 0:1])).reshape(n, -1, h, w)
    meta['reconstruct_image_b_foreground'] = dec(foreground).reshape(n, c_img, h, w)
    meta['keypoints_b_heatmaps'] = logits_b.reshape(n, k, h, w)
    meta['image_a_keypoints_maps'] = maps_a.reshape(n, k, h, w)
    meta['reconstruct_image_b'] = dec(transported).reshape(n, c_img, h, w)
    return meta


# ---------------------------------- main --------------------------------------

if __name__ == "__main__":
    def make_case(seed, n, h, w, c_img, c_feat, k):
        key = jax.random.PRNGKey(seed)
        ks = jax.random.split(key, 8)
        # Channel-first weight layout: out = W @ x_chw + b, matching the kernel.
        params = {
            'enc_w': 0.1 * jax.random.normal(ks[0], (c_feat, c_img), jnp.float32),
            'enc_b': 0.01 * jax.random.normal(ks[1], (c_feat, 1), jnp.float32),
            'kpt_w': 0.1 * jax.random.normal(ks[2], (k, c_img), jnp.float32),
            'kpt_b': 0.01 * jax.random.normal(ks[3], (k, 1), jnp.float32),
            'dec_w': 0.1 * jax.random.normal(ks[4], (c_img, c_feat), jnp.float32),
            'dec_b': 0.01 * jax.random.normal(ks[5], (c_img, 1), jnp.float32),
        }
        image_a = jax.random.normal(ks[6], (n, c_img, h, w), jnp.float32)
        image_b = jax.random.normal(ks[7], (n, c_img, h, w), jnp.float32)
        return params, image_a, image_b

    fwd = jax.jit(self_sup_attention_forward)

    def check(meta, ref):
        assert set(meta.keys()) == set(ref.keys()), (sorted(meta), sorted(ref))
        for name in ref:
            got, want = meta[name], ref[name]
            assert got.shape == want.shape, (name, got.shape, want.shape)
            assert bool(jnp.all(jnp.isfinite(got))), name
            assert bool(jnp.allclose(got, want, rtol=5e-2, atol=5e-3)), name

    # Case 1: K = 4 (standard meta keys).
    params, image_a, image_b = make_case(0, 2, 16, 16, 4, 32, 4)
    meta = fwd(params, image_a, image_b)
    jax.block_until_ready(jax.tree_util.tree_leaves(meta))
    check(meta, _reference_forward(params, image_a, image_b))

    # Case 2: K = 1 (exercises image_b_foreground / image_a_background path).
    params1, image_a1, image_b1 = make_case(1, 2, 16, 16, 4, 32, 1)
    meta1 = fwd(params1, image_a1, image_b1)
    jax.block_until_ready(jax.tree_util.tree_leaves(meta1))
    check(meta1, _reference_forward(params1, image_a1, image_b1))

    print("KERNEL_OK")
</pallas_src>

<mosaic_0001>
module attributes {stable_mosaic.version = 11 : i64} {
  func.func @_selfsup_fused_kernel(%arg0: i32, %arg1: i32, %arg2: memref<1x4x256xf32, #tpu.memory_space<vmem>>, %arg3: memref<1x4x256xf32, #tpu.memory_space<vmem>>, %arg4: memref<36x4xf32, #tpu.memory_space<vmem>>, %arg5: memref<36x1xf32, #tpu.memory_space<vmem>>, %arg6: memref<4x32xf32, #tpu.memory_space<vmem>>, %arg7: memref<4x1xf32, #tpu.memory_space<vmem>>, %arg8: memref<1x4x256xf32, #tpu.memory_space<vmem>>, %arg9: memref<1x4x256xf32, #tpu.memory_space<vmem>>, %arg10: memref<1x4x256xf32, #tpu.memory_space<vmem>>, %arg11: memref<1x4x256xf32, #tpu.memory_space<vmem>>) attributes {dimension_semantics = [#tpu.dimension_semantics<parallel>, #tpu.dimension_semantics<parallel>], iteration_bounds = array<i64: 2, 1>, scalar_prefetch = 0 : i64, scratch_operands = 0 : i64, tpu.core_type = #tpu.core_type<tc>, window_params = [{transform_indices = @transform_0, window_bounds = array<i64: 1, 4, 256>}, {transform_indices = @transform_1, window_bounds = array<i64: 1, 4, 256>}, {pipeline_mode = #tpu.pipeline_mode<synchronous>, transform_indices = @transform_2, window_bounds = array<i64: 36, 4>}, {pipeline_mode = #tpu.pipeline_mode<synchronous>, transform_indices = @transform_3, window_bounds = array<i64: 36, 1>}, {pipeline_mode = #tpu.pipeline_mode<synchronous>, transform_indices = @transform_4, window_bounds = array<i64: 4, 32>}, {pipeline_mode = #tpu.pipeline_mode<synchronous>, transform_indices = @transform_5, window_bounds = array<i64: 4, 1>}, {transform_indices = @transform_6, window_bounds = array<i64: 1, 4, 256>}, {transform_indices = @transform_7, window_bounds = array<i64: 1, 4, 256>}, {transform_indices = @transform_8, window_bounds = array<i64: 1, 4, 256>}, {transform_indices = @transform_9, window_bounds = array<i64: 1, 4, 256>}]} {
    %c0 = arith.constant 0 : index
    %c0_0 = arith.constant 0 : index
    %c0_1 = arith.constant 0 : index
    %0 = vector.load %arg2[%c0, %c0_0, %c0_1] : memref<1x4x256xf32, #tpu.memory_space<vmem>>, vector<1x4x256xf32>
    %1 = vector.shape_cast %0 : vector<1x4x256xf32> to vector<4x256xf32>
    %c0_2 = arith.constant 0 : index
    %c0_3 = arith.constant 0 : index
    %c0_4 = arith.constant 0 : index
    %2 = vector.load %arg3[%c0_2, %c0_3, %c0_4] : memref<1x4x256xf32, #tpu.memory_space<vmem>>, vector<1x4x256xf32>
    %3 = vector.shape_cast %2 : vector<1x4x256xf32> to vector<4x256xf32>
    %c0_5 = arith.constant 0 : index
    %c0_6 = arith.constant 0 : index
    %4 = vector.load %arg4[%c0_5, %c0_6] : memref<36x4xf32, #tpu.memory_space<vmem>>, vector<36x4xf32>
    %c0_7 = arith.constant 0 : index
    %c0_8 = arith.constant 0 : index
    %5 = vector.load %arg5[%c0_7, %c0_8] : memref<36x1xf32, #tpu.memory_space<vmem>>, vector<36x1xf32>
    %c0_9 = arith.constant 0 : index
    %c0_10 = arith.constant 0 : index
    %6 = vector.load %arg6[%c0_9, %c0_10] : memref<4x32xf32, #tpu.memory_space<vmem>>, vector<4x32xf32>
    %c0_11 = arith.constant 0 : index
    %c0_12 = arith.constant 0 : index
    %7 = vector.load %arg7[%c0_11, %c0_12] : memref<4x1xf32, #tpu.memory_space<vmem>>, vector<4x1xf32>
    %cst = arith.constant dense<0.000000e+00> : vector<36x256xf32>
    %8 = tpu.matmul %4, %1, %cst {dimension_numbers = #tpu.dot_dimension_numbers<[1], [0], [0], [1], [0, 0, 1, 1], [], []>} : vector<36x4xf32>, vector<4x256xf32>, vector<36x256xf32> -> vector<36x256xf32>
    %9 = vector.broadcast %5 : vector<36x1xf32> to vector<36x256xf32>
    %10 = arith.addf %8, %9 : vector<36x256xf32>
    %11 = vector.extract_strided_slice %10 {offsets = [0, 0], sizes = [32, 256], strides = [1, 1]} : vector<36x256xf32> to vector<32x256xf32>
    %cst_13 = arith.constant 0.000000e+00 : f32
    %12 = vector.broadcast %cst_13 : f32 to vector<32x256xf32>
    %13 = arith.maximumf %11, %12 : vector<32x256xf32>
    %14 = vector.extract_strided_slice %10 {offsets = [32, 0], sizes = [4, 256], strides = [1, 1]} : vector<36x256xf32> to vector<4x256xf32>
    %cst_14 = arith.constant dense<0.000000e+00> : vector<36x256xf32>
    %15 = tpu.matmul %4, %3, %cst_14 {dimension_numbers = #tpu.dot_dimension_numbers<[1], [0], [0], [1], [0, 0, 1, 1], [], []>} : vector<36x4xf32>, vector<4x256xf32>, vector<36x256xf32> -> vector<36x256xf32>
    %16 = vector.broadcast %5 : vector<36x1xf32> to vector<36x256xf32>
    %17 = arith.addf %15, %16 : vector<36x256xf32>
    %18 = vector.extract_strided_slice %17 {offsets = [0, 0], sizes = [32, 256], strides = [1, 1]} : vector<36x256xf32> to vector<32x256xf32>
    %cst_15 = arith.constant 0.000000e+00 : f32
    %19 = vector.broadcast %cst_15 : f32 to vector<32x256xf32>
    %20 = arith.maximumf %18, %19 : vector<32x256xf32>
    %21 = vector.extract_strided_slice %17 {offsets = [32, 0], sizes = [4, 256], strides = [1, 1]} : vector<36x256xf32> to vector<4x256xf32>
    %22 = arith.negf %14 : vector<4x256xf32>
    %23 = math.exp %22 : vector<4x256xf32>
    %cst_16 = arith.constant 1.000000e+00 : f32
    %24 = vector.broadcast %cst_16 : f32 to vector<4x256xf32>
    %25 = arith.addf %24, %23 : vector<4x256xf32>
    %26 = arith.divf %24, %25 : vector<4x256xf32>
    %27 = arith.negf %21 : vector<4x256xf32>
    %28 = math.exp %27 : vector<4x256xf32>
    %cst_17 = arith.constant 1.000000e+00 : f32
    %29 = vector.broadcast %cst_17 : f32 to vector<4x256xf32>
    %30 = arith.addf %29, %28 : vector<4x256xf32>
    %31 = arith.divf %29, %30 : vector<4x256xf32>
    %cst_18 = arith.constant 1.000000e+00 : f32
    %32 = vector.broadcast %cst_18 : f32 to vector<4x256xf32>
    %33 = arith.subf %32, %26 : vector<4x256xf32>
    %cst_19 = arith.constant 1.000000e+00 : f32
    %34 = vector.broadcast %cst_19 : f32 to vector<4x256xf32>
    %35 = arith.subf %34, %31 : vector<4x256xf32>
    %36 = arith.mulf %33, %35 : vector<4x256xf32>
    %37 = vector.extract_strided_slice %31 {offsets = [3, 0], sizes = [1, 256], strides = [1, 1]} : vector<4x256xf32> to vector<1x256xf32>
    %38 = vector.extract_strided_slice %36 {offsets = [3, 0], sizes = [1, 256], strides = [1, 1]} : vector<4x256xf32> to vector<1x256xf32>
    %39 = vector.extract_strided_slice %31 {offsets = [2, 0], sizes = [1, 256], strides = [1, 1]} : vector<4x256xf32> to vector<1x256xf32>
    %40 = arith.mulf %39, %38 : vector<1x256xf32>
    %41 = arith.addf %37, %40 : vector<1x256xf32>
    %42 = vector.extract_strided_slice %36 {offsets = [2, 0], sizes = [1, 256], strides = [1, 1]} : vector<4x256xf32> to vector<1x256xf32>
    %43 = arith.mulf %38, %42 : vector<1x256xf32>
    %44 = vector.extract_strided_slice %31 {offsets = [1, 0], sizes = [1, 256], strides = [1, 1]} : vector<4x256xf32> to vector<1x256xf32>
    %45 = arith.mulf %44, %43 : vector<1x256xf32>
    %46 = arith.addf %41, %45 : vector<1x256xf32>
    %47 = vector.extract_strided_slice %36 {offsets = [1, 0], sizes = [1, 256], strides = [1, 1]} : vector<4x256xf32> to vector<1x256xf32>
    %48 = arith.mulf %43, %47 : vector<1x256xf32>
    %49 = vector.extract_strided_slice %31 {offsets = [0, 0], sizes = [1, 256], strides = [1, 1]} : vector<4x256xf32> to vector<1x256xf32>
    %50 = arith.mulf %49, %48 : vector<1x256xf32>
    %51 = arith.addf %46, %50 : vector<1x256xf32>
    %52 = vector.extract_strided_slice %36 {offsets = [0, 0], sizes = [1, 256], strides = [1, 1]} : vector<4x256xf32> to vector<1x256xf32>
    %53 = arith.mulf %48, %52 : vector<1x256xf32>
    %54 = vector.broadcast %53 : vector<1x256xf32> to vector<32x256xf32>
    %55 = arith.mulf %54, %13 : vector<32x256xf32>
    %56 = vector.broadcast %51 : vector<1x256xf32> to vector<32x256xf32>
    %57 = arith.mulf %56, %20 : vector<32x256xf32>
    %58 = arith.addf %55, %57 : vector<32x256xf32>
    %59 = vector.extract_strided_slice %31 {offsets = [3, 0], sizes = [1, 256], strides = [1, 1]} : vector<4x256xf32> to vector<1x256xf32>
    %60 = vector.broadcast %59 : vector<1x256xf32> to vector<32x256xf32>
    %61 = arith.mulf %60, %20 : vector<32x256xf32>
    %cst_20 = arith.constant dense<0.000000e+00> : vector<4x256xf32>
    %62 = tpu.matmul %6, %58, %cst_20 {dimension_numbers = #tpu.dot_dimension_numbers<[1], [0], [0], [1], [0, 0, 1, 1], [], []>} : vector<4x32xf32>, vector<32x256xf32>, vector<4x256xf32> -> vector<4x256xf32>
    %63 = vector.broadcast %7 : vector<4x1xf32> to vector<4x256xf32>
    %64 = arith.addf %62, %63 : vector<4x256xf32>
    %c0_21 = arith.constant 0 : index
    %c0_22 = arith.constant 0 : index
    %c0_23 = arith.constant 0 : index
    %65 = vector.load %arg8[%c0_21, %c0_22, %c0_23] : memref<1x4x256xf32, #tpu.memory_space<vmem>>, vector<1x4x256xf32>
    %66 = vector.shape_cast %65 : vector<1x4x256xf32> to vector<4x256xf32>
    %67 = vector.shape_cast %64 : vector<4x256xf32> to vector<1x4x256xf32>
    tpu.vector_store %arg8[%c0_21, %c0_22, %c0_23], %67 {strides = array<i32>} : memref<1x4x256xf32, #tpu.memory_space<vmem>>, vector<1x4x256xf32>,
    %cst_24 = arith.constant dense<0.000000e+00> : vector<4x256xf32>
    %68 = tpu.matmul %6, %61, %cst_24 {dimension_numbers = #tpu.dot_dimension_numbers<[1], [0], [0], [1], [0, 0, 1, 1], [], []>} : vector<4x32xf32>, vector<32x256xf32>, vector<4x256xf32> -> vector<4x256xf32>
    %69 = vector.broadcast %7 : vector<4x1xf32> to vector<4x256xf32>
    %70 = arith.addf %68, %69 : vector<4x256xf32>
    %c0_25 = arith.constant 0 : index
    %c0_26 = arith.constant 0 : index
    %c0_27 = arith.constant 0 : index
    %71 = vector.load %arg9[%c0_25, %c0_26, %c0_27] : memref<1x4x256xf32, #tpu.memory_space<vmem>>, vector<1x4x256xf32>
    %72 = vector.shape_cast %71 : vector<1x4x256xf32> to vector<4x256xf32>
    %73 = vector.shape_cast %70 : vector<4x256xf32> to vector<1x4x256xf32>
    tpu.vector_store %arg9[%c0_25, %c0_26, %c0_27], %73 {strides = array<i32>} : memref<1x4x256xf32, #tpu.memory_space<vmem>>, vector<1x4x256xf32>,
    %c0_28 = arith.constant 0 : index
    %c0_29 = arith.constant 0 : index
    %c0_30 = arith.constant 0 : index
    %74 = vector.load %arg10[%c0_28, %c0_29, %c0_30] : memref<1x4x256xf32, #tpu.memory_space<vmem>>, vector<1x4x256xf32>
    %75 = vector.shape_cast %74 : vector<1x4x256xf32> to vector<4x256xf32>
    %76 = vector.shape_cast %21 : vector<4x256xf32> to vector<1x4x256xf32>
    tpu.vector_store %arg10[%c0_28, %c0_29, %c0_30], %76 {strides = array<i32>} : memref<1x4x256xf32, #tpu.memory_space<vmem>>, vector<1x4x256xf32>,
    %c0_31 = arith.constant 0 : index
    %c0_32 = arith.constant 0 : index
    %c0_33 = arith.constant 0 : index
    %77 = vector.load %arg11[%c0_31, %c0_32, %c0_33] : memref<1x4x256xf32, #tpu.memory_space<vmem>>, vector<1x4x256xf32>
    %78 = vector.shape_cast %77 : vector<1x4x256xf32> to vector<4x256xf32>
    %79 = vector.shape_cast %26 : vector<4x256xf32> to vector<1x4x256xf32>
    tpu.vector_store %arg11[%c0_31, %c0_32, %c0_33], %79 {strides = array<i32>} : memref<1x4x256xf32, #tpu.memory_space<vmem>>, vector<1x4x256xf32>,
    return
  }
  func.func @transform_0(%arg0: i32, %arg1: i32) -> (i32, i32, i32) {
    %c0_i32 = arith.constant 0 : i32
    %c0_i32_0 = arith.constant 0 : i32
    return %arg0, %c0_i32, %arg1 : i32, i32, i32
  }
  func.func @transform_1(%arg0: i32, %arg1: i32) -> (i32, i32, i32) {
    %c0_i32 = arith.constant 0 : i32
    %c0_i32_0 = arith.constant 0 : i32
    return %arg0, %c0_i32, %arg1 : i32, i32, i32
  }
  func.func @transform_2(%arg0: i32, %arg1: i32) -> (i32, i32) {
    %c0_i32 = arith.constant 0 : i32
    %c0_i32_0 = arith.constant 0 : i32
    %c0_i32_1 = arith.constant 0 : i32
    return %c0_i32, %c0_i32_0 : i32, i32
  }
  func.func @transform_3(%arg0: i32, %arg1: i32) -> (i32, i32) {
    %c0_i32 = arith.constant 0 : i32
    %c0_i32_0 = arith.constant 0 : i32
    %c0_i32_1 = arith.constant 0 : i32
    return %c0_i32, %c0_i32_0 : i32, i32
  }
  func.func @transform_4(%arg0: i32, %arg1: i32) -> (i32, i32) {
    %c0_i32 = arith.constant 0 : i32
    %c0_i32_0 = arith.constant 0 : i32
    %c0_i32_1 = arith.constant 0 : i32
    return %c0_i32, %c0_i32_0 : i32, i32
  }
  func.func @transform_5(%arg0: i32, %arg1: i32) -> (i32, i32) {
    %c0_i32 = arith.constant 0 : i32
    %c0_i32_0 = arith.constant 0 : i32
    %c0_i32_1 = arith.constant 0 : i32
    return %c0_i32, %c0_i32_0 : i32, i32
  }
  func.func @transform_6(%arg0: i32, %arg1: i32) -> (i32, i32, i32) {
    %c0_i32 = arith.constant 0 : i32
    %c0_i32_0 = arith.constant 0 : i32
    return %arg0, %c0_i32, %arg1 : i32, i32, i32
  }
  func.func @transform_7(%arg0: i32, %arg1: i32) -> (i32, i32, i32) {
    %c0_i32 = arith.constant 0 : i32
    %c0_i32_0 = arith.constant 0 : i32
    return %arg0, %c0_i32, %arg1 : i32, i32, i32
  }
  func.func @transform_8(%arg0: i32, %arg1: i32) -> (i32, i32, i32) {
    %c0_i32 = arith.constant 0 : i32
    %c0_i32_0 = arith.constant 0 : i32
    return %arg0, %c0_i32, %arg1 : i32, i32, i32
  }
  func.func @transform_9(%arg0: i32, %arg1: i32) -> (i32, i32, i32) {
    %c0_i32 = arith.constant 0 : i32
    %c0_i32_0 = arith.constant 0 : i32
    return %arg0, %c0_i32, %arg1 : i32, i32, i32
  }
}

</mosaic_0001>

<llo_original>
// kernel: self_sup_attention_forward.1
$region0: #{self_sup_attention_forward.1}
  #allocation0 [shape = 'u32[]', space=smem, size = 0x4, offset = 0x4, fixed_abs, tag = 'smem constant byte address 0x4 - core index']
  #allocation1 [shape = 'u32[144,128]{1,0:T(1,128)}', space=vmem, size = 0x12000, scoped, tag = 'internal scratch']
  %s0 = inlined_call_operand.hbm [shape: f32[2,4,256], index: 0, kind: input, shape index: {}]
  %s1 = inlined_call_operand.hbm [shape: f32[2,4,256], index: 1, kind: input, shape index: {}]
  %s2 = inlined_call_operand.hbm [shape: f32[36,4], index: 2, kind: input, shape index: {}]
  %s3 = inlined_call_operand.hbm [shape: f32[36,1], index: 3, kind: input, shape index: {}]
  %s4 = inlined_call_operand.hbm [shape: f32[4,32], index: 4, kind: input, shape index: {}]
  %s5 = inlined_call_operand.hbm [shape: f32[4,1], index: 5, kind: input, shape index: {}]
  %s6 = inlined_call_operand.hbm [shape: f32[2,4,256], index: 6, kind: output, shape index: {0}]
  %s7 = inlined_call_operand.hbm [shape: f32[2,4,256], index: 7, kind: output, shape index: {1}]
  %s8 = inlined_call_operand.hbm [shape: f32[2,4,256], index: 8, kind: output, shape index: {2}]
  %s9 = inlined_call_operand.hbm [shape: f32[2,4,256], index: 9, kind: output, shape index: {3}]
  %10 = xla_tuple %s6, %s7, %s8, %s9
  %s11 = sld [smem:[#allocation0]]
  $region105: #{self_sup_attention_forward.1} parent=0
    _
  %s13 = ssub.s32 1, %s11
  %s14 = scalar_select 0, %s13, %s11
  $region1: #{self_sup_attention_forward.1} parent=0
    #allocation2 [shape = 'u8[8192]{0}', space=vmem, size = 0x2000, scoped, tag = 'input window, operand 0']
    #allocation3 [shape = 's32[2]{0}', space=sflag, size = 0x8, scoped, tag = 'scoped memory for self_sup_attention_forward.1']
    #allocation4 [shape = 's32[2]{0}', space=sflag, size = 0x8, scoped, tag = 'scoped memory for self_sup_attention_forward.1']
    #allocation5 [shape = 'u8[8192]{0}', space=vmem, size = 0x2000, scoped, tag = 'input window, operand 1']
    #allocation6 [shape = 's32[2]{0}', space=sflag, size = 0x8, scoped, tag = 'scoped memory for self_sup_attention_forward.1']
    #allocation7 [shape = 'u8[20480]{0}', space=vmem, size = 0x5000, scoped, tag = 'input window, operand 2, single buffered']
    #allocation8 [shape = 'u8[20480]{0}', space=vmem, size = 0x5000, scoped, tag = 'input window, operand 3, single buffered']
    #allocation9 [shape = 's32[1]{0}', space=sflag, size = 0x4, scoped, tag = 'scoped memory for self_sup_attention_forward.1']
    #allocation10 [shape = 'u8[2048]{0}', space=vmem, size = 0x800, scoped, tag = 'input window, operand 4, single buffered']
    #allocation11 [shape = 'u8[2048]{0}', space=vmem, size = 0x800, scoped, tag = 'input window, operand 5, single buffered']
    #allocation12 [shape = 's32[1]{0}', space=sflag, size = 0x4, scoped, tag = 'scoped memory for self_sup_attention_forward.1']
    #allocation13 [shape = 'u8[8192]{0}', space=vmem, size = 0x2000, scoped, tag = 'output window, operand 0']
    #allocation14 [shape = 'u8[8192]{0}', space=vmem, size = 0x2000, scoped, tag = 'output window, operand 1']
    #allocation15 [shape = 's32[2]{0}', space=sflag, size = 0x8, scoped, tag = 'scoped memory for self_sup_attention_forward.1']
    #allocation16 [shape = 'u8[8192]{0}', space=vmem, size = 0x2000, scoped, tag = 'output window, operand 2']
    #allocation17 [shape = 'u8[8192]{0}', space=vmem, size = 0x2000, scoped, tag = 'output window, operand 3']
    #allocation18 [shape = 's32[2]{0}', space=sflag, size = 0x8, scoped, tag = 'scoped memory for self_sup_attention_forward.1']
    %15 = vsyncpa [#allocation3], 0
    %s16 = scalar_lea.sflag [#allocation3], 1
    %17 = vsyncpa %s16, 0
    %18 = vsyncpa [#allocation6], 0
    %s19 = scalar_lea.sflag [#allocation6], 1
    %20 = vsyncpa %s19, 0
    %21 = vsyncpa [#allocation9], 0
    %22 = vsyncpa [#allocation12], 0
    %23 = vsyncpa [#allocation4], 0
    %s24 = scalar_lea.sflag [#allocation4], 1
    %25 = vsyncpa %s24, 0
    %26 = vsyncpa [#allocation15], 0
    %s27 = scalar_lea.sflag [#allocation15], 1
    %28 = vsyncpa %s27, 0
    %29 = vsyncpa [#allocation18], 0
    %s30 = scalar_lea.sflag [#allocation18], 1
    %31 = vsyncpa %s30, 0
    loop: start=0, step=1, limit=4
    $region2: #{self_sup_attention_forward.1} parent=1 // loop_pre_header
      _
    $region3: #{self_sup_attention_forward.1} parent=1 // loop_header
      %s33 = sphi 0, %s37
      %p34 = scmp.ge.s32.totalorder %s33, 4
      %s40 = sphi 0, %s52
      %s41 = sphi 0, %s48
      %s42 = sphi 0, %s40
      %s43 = sphi 0, %s41
      %s44 = sphi 0, %s42
      %s45 = sphi 0, %s43
      %s57 = sphi 0, %s59
      %s60 = sphi 0, %s57
      %s61 = sphi 0, %s60
      %s77 = sphi 0, %s61
      %s85 = sphi 0, %s87
      %s88 = sphi 0, %s85
      %s89 = sphi 0, %s88
      %s105 = sphi 0, %s89
      %s109 = sphi 0, %s109
      %s111 = sphi 0, %s109
      %s112 = sphi 0, %s111
      %s126 = sphi 0, %s112
      %s130 = sphi 0, %s130
      %s132 = sphi 0, %s130
      %s133 = sphi 0, %s132
      %s147 = sphi 0, %s133
      %s151 = sphi 0, %s151
      %s153 = sphi 0, %s151
      %s154 = sphi 0, %s153
      %s168 = sphi 0, %s154
      %s172 = sphi 0, %s172
      %s174 = sphi 0, %s172
      %s175 = sphi 0, %s174
      %s189 = sphi 0, %s175
      %s197 = sphi 0, %s199
      %s200 = sphi 0, %s197
      %s201 = sphi 0, %s200
      %s217 = sphi 0, %s201
      %s225 = sphi 0, %s227
      %s228 = sphi 0, %s225
      %s229 = sphi 0, %s228
      %s245 = sphi 0, %s229
      %s253 = sphi 0, %s255
      %s256 = sphi 0, %s253
      %s257 = sphi 0, %s256
      %s273 = sphi 0, %s257
      %s281 = sphi 0, %s283
      %s284 = sphi 0, %s281
      %s285 = sphi 0, %s284
      %s301 = sphi 0, %s285
    $region4: #{self_sup_attention_forward.1} parent=1 // loop_header_branch
      %36 = sbr.rel (%p34) target = $region8
    $region5: #{self_sup_attention_forward.1} parent=1 // loop_body
      %s38 = ssub.s32 %s33, 1
      %s39 = ssub.s32 %s33, 2
      %s46 = sadd.s32 1, %s41
      %p47 = scmp.ge.s32.totalorder %s46, 1
      %s48 = scalar_select %p47, 0, %s46
      %s49 = sadd.s32 1, %s40
      %s50 = scalar_select %p47, %s49, %s40
      %p51 = scmp.ge.s32.totalorder %s50, 2
      %s52 = scalar_select %p51, 0, %s50
      %s53 = ssub.s32 %s40, %s52
      %s54 = ssub.s32 %s41, %s48
      %s55 = sor.u32 %s53, %s54
      %p56 = scmp.eq.s32.totalorder %s55, 0
      %s58 = sadd.s32 %s57, 1
      %s59 = scalar_select %p56, %s57, %s58
      %p62 = pneg %p56
      %p63 = scmp.eq.s32.totalorder %s33, 1
      %p64 = por %p62, %p63
      %p65 = scmp.ne.s32.totalorder %s57, %s60
      %p66 = scmp.eq.s32.totalorder %s33, 0
      %p67 = por %p65, %p66
      %p68 = scmp.ne.s32.totalorder %s57, %s60
      %p69 = scmp.eq.s32.totalorder %s38, 1
      %p70 = por %p68, %p69
      %p71 = scmp.ne.s32.totalorder %s60, %s61
      %p72 = scmp.eq.s32.totalorder %s38, 0
      %p73 = por %p71, %p72
      %p74 = scmp.ne.s32.totalorder %s60, %s61
      %p75 = scmp.eq.s32.totalorder %s39, 1
      %p76 = por %p74, %p75
      %p78 = scmp.ne.s32.totalorder %s61, %s77
      %p79 = scmp.eq.s32.totalorder %s39, 0
      %p80 = por %p78, %p79
      %s81 = ssub.s32 %s40, %s52
      %s82 = ssub.s32 %s41, %s48
      %s83 = sor.u32 %s81, %s82
      %p84 = scmp.eq.s32.totalorder %s83, 0
      %s86 = sadd.s32 %s85, 1
      %s87 = scalar_select %p84, %s85, %s86
      %p90 = pneg %p84
      %p91 = scmp.eq.s32.totalorder %s33, 1
      %p92 = por %p90, %p91
      %p93 = scmp.ne.s32.totalorder %s85, %s88
      %p94 = scmp.eq.s32.totalorder %s33, 0
      %p95 = por %p93, %p94
      %p96 = scmp.ne.s32.totalorder %s85, %s88
      %p97 = scmp.eq.s32.totalorder %s38, 1
      %p98 = por %p96, %p97
      %p99 = scmp.ne.s32.totalorder %s88, %s89
      %p100 = scmp.eq.s32.totalorder %s38, 0
      %p101 = por %p99, %p100
      %p102 = scmp.ne.s32.totalorder %s88, %s89
      %p103 = scmp.eq.s32.totalorder %s39, 1
      %p104 = por %p102, %p103
      %p106 = scmp.ne.s32.totalorder %s89, %s105
      %p107 = scmp.eq.s32.totalorder %s39, 0
      %p108 = por %p106, %p107
      %s110 = sadd.s32 %s109, 1
      %p113 = scmp.eq.s32.totalorder %s33, 1
      %p114 = scmp.ne.s32.totalorder %s109, %s111
      %p115 = scmp.eq.s32.totalorder %s33, 0
      %p116 = por %p114, %p115
      %p117 = scmp.ne.s32.totalorder %s109, %s111
      %p118 = scmp.eq.s32.totalorder %s38, 1
      %p119 = por %p117, %p118
      %p120 = scmp.ne.s32.totalorder %s111, %s112
      %p121 = scmp.eq.s32.totalorder %s38, 0
      %p122 = por %p120, %p121
      %p123 = scmp.ne.s32.totalorder %s111, %s112
      %p124 = scmp.eq.s32.totalorder %s39, 1
      %p125 = por %p123, %p124
      %p127 = scmp.ne.s32.totalorder %s112, %s126
      %p128 = scmp.eq.s32.totalorder %s39, 0
      %p129 = por %p127, %p128
      %s131 = sadd.s32 %s130, 1
      %p134 = scmp.eq.s32.totalorder %s33, 1
      %p135 = scmp.ne.s32.totalorder %s130, %s132
      %p136 = scmp.eq.s32.totalorder %s33, 0
      %p137 = por %p135, %p136
      %p138 = scmp.ne.s32.totalorder %s130, %s132
      %p139 = scmp.eq.s32.totalorder %s38, 1
      %p140 = por %p138, %p139
      %p141 = scmp.ne.s32.totalorder %s132, %s133
      %p142 = scmp.eq.s32.totalorder %s38, 0
      %p143 = por %p141, %p142
      %p144 = scmp.ne.s32.totalorder %s132, %s133
      %p145 = scmp.eq.s32.totalorder %s39, 1
      %p146 = por %p144, %p145
      %p148 = scmp.ne.s32.totalorder %s133, %s147
      %p149 = scmp.eq.s32.totalorder %s39, 0
      %p150 = por %p148, %p149
      %s152 = sadd.s32 %s151, 1
      %p155 = scmp.eq.s32.totalorder %s33, 1
      %p156 = scmp.ne.s32.totalorder %s151, %s153
      %p157 = scmp.eq.s32.totalorder %s33, 0
      %p158 = por %p156, %p157
      %p159 = scmp.ne.s32.totalorder %s151, %s153
      %p160 = scmp.eq.s32.totalorder %s38, 1
      %p161 = por %p159, %p160
      %p162 = scmp.ne.s32.totalorder %s153, %s154
      %p163 = scmp.eq.s32.totalorder %s38, 0
      %p164 = por %p162, %p163
      %p165 = scmp.ne.s32.totalorder %s153, %s154
      %p166 = scmp.eq.s32.totalorder %s39, 1
      %p167 = por %p165, %p166
      %p169 = scmp.ne.s32.totalorder %s154, %s168
      %p170 = scmp.eq.s32.totalorder %s39, 0
      %p171 = por %p169, %p170
      %s173 = sadd.s32 %s172, 1
      %p176 = scmp.eq.s32.totalorder %s33, 1
      %p177 = scmp.ne.s32.totalorder %s172, %s174
      %p178 = scmp.eq.s32.totalorder %s33, 0
      %p179 = por %p177, %p178
      %p180 = scmp.ne.s32.totalorder %s172, %s174
      %p181 = scmp.eq.s32.totalorder %s38, 1
      %p182 = por %p180, %p181
      %p183 = scmp.ne.s32.totalorder %s174, %s175
      %p184 = scmp.eq.s32.totalorder %s38, 0
      %p185 = por %p183, %p184
      %p186 = scmp.ne.s32.totalorder %s174, %s175
      %p187 = scmp.eq.s32.totalorder %s39, 1
      %p188 = por %p186, %p187
      %p190 = scmp.ne.s32.totalorder %s175, %s189
      %p191 = scmp.eq.s32.totalorder %s39, 0
      %p192 = por %p190, %p191
      %s193 = ssub.s32 %s40, %s52
      %s194 = ssub.s32 %s41, %s48
      %s195 = sor.u32 %s193, %s194
      %p196 = scmp.eq.s32.totalorder %s195, 0
      %s198 = sadd.s32 %s197, 1
      %s199 = scalar_select %p196, %s197, %s198
      %p202 = pneg %p196
      %p203 = scmp.eq.s32.totalorder %s33, 1
      %p204 = por %p202, %p203
      %p205 = scmp.ne.s32.totalorder %s197, %s200
      %p206 = scmp.eq.s32.totalorder %s33, 0
      %p207 = por %p205, %p206
      %p208 = scmp.ne.s32.totalorder %s197, %s200
      %p209 = scmp.eq.s32.totalorder %s38, 1
      %p210 = por %p208, %p209
      %p211 = scmp.ne.s32.totalorder %s200, %s201
      %p212 = scmp.eq.s32.totalorder %s38, 0
      %p213 = por %p211, %p212
      %p214 = scmp.ne.s32.totalorder %s200, %s201
      %p215 = scmp.eq.s32.totalorder %s39, 1
      %p216 = por %p214, %p215
      %p218 = scmp.ne.s32.totalorder %s201, %s217
      %p219 = scmp.eq.s32.totalorder %s39, 0
      %p220 = por %p218, %p219
      %s221 = ssub.s32 %s40, %s52
      %s222 = ssub.s32 %s41, %s48
      %s223 = sor.u32 %s221, %s222
      %p224 = scmp.eq.s32.totalorder %s223, 0
      %s226 = sadd.s32 %s225, 1
      %s227 = scalar_select %p224, %s225, %s226
      %p230 = pneg %p224
      %p231 = scmp.eq.s32.totalorder %s33, 1
      %p232 = por %p230, %p231
      %p233 = scmp.ne.s32.totalorder %s225, %s228
      %p234 = scmp.eq.s32.totalorder %s33, 0
      %p235 = por %p233, %p234
      %p236 = scmp.ne.s32.totalorder %s225, %s228
      %p237 = scmp.eq.s32.totalorder %s38, 1
      %p238 = por %p236, %p237
      %p239 = scmp.ne.s32.totalorder %s228, %s229
      %p240 = scmp.eq.s32.totalorder %s38, 0
      %p241 = por %p239, %p240
      %p242 = scmp.ne.s32.totalorder %s228, %s229
      %p243 = scmp.eq.s32.totalorder %s39, 1
      %p244 = por %p242, %p243
      %p246 = scmp.ne.s32.totalorder %s229, %s245
      %p247 = scmp.eq.s32.totalorder %s39, 0
      %p248 = por %p246, %p247
      %s249 = ssub.s32 %s40, %s52
      %s250 = ssub.s32 %s41, %s48
      %s251 = sor.u32 %s249, %s250
      %p252 = scmp.eq.s32.totalorder %s251, 0
      %s254 = sadd.s32 %s253, 1
      %s255 = scalar_select %p252, %s253, %s254
      %p258 = pneg %p252
      %p259 = scmp.eq.s32.totalorder %s33, 1
      %p260 = por %p258, %p259
      %p261 = scmp.ne.s32.totalorder %s253, %s256
      %p262 = scmp.eq.s32.totalorder %s33, 0
      %p263 = por %p261, %p262
      %p264 = scmp.ne.s32.totalorder %s253, %s256
      %p265 = scmp.eq.s32.totalorder %s38, 1
      %p266 = por %p264, %p265
      %p267 = scmp.ne.s32.totalorder %s256, %s257
      %p268 = scmp.eq.s32.totalorder %s38, 0
      %p269 = por %p267, %p268
      %p270 = scmp.ne.s32.totalorder %s256, %s257
      %p271 = scmp.eq.s32.totalorder %s39, 1
      %p272 = por %p270, %p271
      %p274 = scmp.ne.s32.totalorder %s257, %s273
      %p275 = scmp.eq.s32.totalorder %s39, 0
      %p276 = por %p274, %p275
      %s277 = ssub.s32 %s40, %s52
      %s278 = ssub.s32 %s41, %s48
      %s279 = sor.u32 %s277, %s278
      %p280 = scmp.eq.s32.totalorder %s279, 0
      %s282 = sadd.s32 %s281, 1
      %s283 = scalar_select %p280, %s281, %s282
      %p286 = pneg %p280
      %p287 = scmp.eq.s32.totalorder %s33, 1
      %p288 = por %p286, %p287
      %p289 = scmp.ne.s32.totalorder %s281, %s284
      %p290 = scmp.eq.s32.totalorder %s33, 0
      %p291 = por %p289, %p290
      %p292 = scmp.ne.s32.totalorder %s281, %s284
      %p293 = scmp.eq.s32.totalorder %s38, 1
      %p294 = por %p292, %p293
      %p295 = scmp.ne.s32.totalorder %s284, %s285
      %p296 = scmp.eq.s32.totalorder %s38, 0
      %p297 = por %p295, %p296
      %p298 = scmp.ne.s32.totalorder %s284, %s285
      %p299 = scmp.eq.s32.totalorder %s39, 1
      %p300 = por %p298, %p299
      %p302 = scmp.ne.s32.totalorder %s285, %s301
      %p303 = scmp.eq.s32.totalorder %s39, 0
      %p304 = por %p302, %p303
      %p305 = scmp.le.s32.totalorder 1, %s33
      %p306 = scmp.lt.s32.totalorder %s33, 3
      %p307 = pnand %p305, %p306
      %p308 = pneg %p307
      // Predicated region
      $region9: #{self_sup_attention_forward.1} parent=5 // pred_check
        _
      $region10: #{self_sup_attention_forward.1} parent=5 // pred_check_branch
        %310 = sbr.rel (%p307) target = $region12
      $region11: #{self_sup_attention_forward.1} parent=5 // pred_region
        %s311 = ssub.s32 %s33, 1
        // Predicated region
        $region13: #{self_sup_attention_forward.1} parent=11 // pred_check
          %p312 = pneg %p122
        $region14: #{self_sup_attention_forward.1} parent=11 // pred_check_branch
          %314 = sbr.rel (%p312) target = $region16
        $region15: #{self_sup_attention_forward.1} parent=11 // pred_region
          %s316 = ssub.s32 640, 640
          %317 = vsyncadd [#allocation6], %s316
          %s318 = sshll.u32 [#allocation7], 4
          %s319 = int_to_ptr.vmem [resolvable:$true] %s318
          %324 = dma.hbm_to_vmem [thread:$0]  %s2, 640, %s319, [#allocation6], 128, 128, 8
        $region16: #{self_sup_attention_forward.1} parent=11 // pred_fallthru
          _
        // Predicated region
        $region17: #{self_sup_attention_forward.1} parent=11 // pred_check
          %p325 = pneg %p143
        $region18: #{self_sup_attention_forward.1} parent=11 // pred_check_branch
          %327 = sbr.rel (%p325) target = $region20
        $region19: #{self_sup_attention_forward.1} parent=11 // pred_region
          %s329 = ssub.s32 640, 640
          %330 = vsyncadd [#allocation9], %s329
          %s331 = sshll.u32 [#allocation8], 4
          %s332 = int_to_ptr.vmem [resolvable:$true] %s331
          %337 = dma.hbm_to_vmem [thread:$0]  %s3, 640, %s332, [#allocation9], 128, 128, 8
        $region20: #{self_sup_attention_forward.1} parent=11 // pred_fallthru
          _
        // Predicated region
        $region21: #{self_sup_attention_forward.1} parent=11 // pred_check
          %p338 = pneg %p164
        $region22: #{self_sup_attention_forward.1} parent=11 // pred_check_branch
          %340 = sbr.rel (%p338) target = $region24
        $region23: #{self_sup_attention_forward.1} parent=11 // pred_region
          %s342 = ssub.s32 64, 64
          %343 = vsyncadd [#allocation9], %s342
          %s345 = sshll.u32 [#allocation10], 4
          %s346 = int_to_ptr.vmem [resolvable:$true] %s345
          %348 = dma.hbm_to_vmem [thread:$0]  %s4, 64, %s346, [#allocation9]
        $region24: #{self_sup_attention_forward.1} parent=11 // pred_fallthru
          _
        // Predicated region
        $region25: #{self_sup_attention_forward.1} parent=11 // pred_check
          %p349 = pneg %p185
        $region26: #{self_sup_attention_forward.1} parent=11 // pred_check_branch
          %351 = sbr.rel (%p349) target = $region28
        $region27: #{self_sup_attention_forward.1} parent=11 // pred_region
          %s353 = ssub.s32 64, 64
          %354 = vsyncadd [#allocation12], %s353
          %s356 = sshll.u32 [#allocation11], 4
          %s357 = int_to_ptr.vmem [resolvable:$true] %s356
          %359 = dma.hbm_to_vmem [thread:$0]  %s5, 64, %s357, [#allocation12]
        $region28: #{self_sup_attention_forward.1} parent=11 // pred_fallthru
          _
      $region12: #{self_sup_attention_forward.1} parent=5 // pred_fallthru
        _
      %p360 = scmp.lt.s32.totalorder %s33, 2
      // Predicated region
      $region29: #{self_sup_attention_forward.1} parent=5 // pred_check
        %p361 = pneg %p360
      $region30: #{self_sup_attention_forward.1} parent=5 // pred_check_branch
        %363 = sbr.rel (%p361) target = $region32
      $region31: #{self_sup_attention_forward.1} parent=5 // pred_region
        // Predicated region
        $region33: #{self_sup_attention_forward.1} parent=31 // pred_check
          %p364 = pneg %p67
        $region34: #{self_sup_attention_forward.1} parent=31 // pred_check_branch
          %366 = sbr.rel (%p364) target = $region36
        $region35: #{self_sup_attention_forward.1} parent=31 // pred_region
          %s367 = sand.u32 %s57, 1
          %s368 = scalar_lea.sflag [#allocation3], %s367
          %s369 = sand.u32 %s57, 1
          %s370 = smul.addr %s369, 8
          %s371 = scalar_lea.vmem [#allocation2], %s370
          %s372 = smul.u32 2, %s41
          %s374 = ssub.s32 128, 128
          %375 = vsyncadd %s368, %s374
          %s376 = smul.addr %s40, 2
          %s377 = sadd.s32 %s372, %s376
          %s378 = smul.addr %s377, 64
          %s379 = scalar_lea.hbm %s0, %s378
          %s381 = sshll.u32 %s371, 4
          %s382 = int_to_ptr.vmem [resolvable:$true] %s381
          %384 = dma.hbm_to_vmem [thread:$0]  %s379, 128, %s382, %s368
        $region36: #{self_sup_attention_forward.1} parent=31 // pred_fallthru
          _
        // Predicated region
        $region37: #{self_sup_attention_forward.1} parent=31 // pred_check
          %p385 = pneg %p95
        $region38: #{self_sup_attention_forward.1} parent=31 // pred_check_branch
          %387 = sbr.rel (%p385) target = $region40
        $region39: #{self_sup_attention_forward.1} parent=31 // pred_region
          %s388 = sand.u32 %s33, 1
          %s389 = scalar_lea.sflag [#allocation6], %s388
          %s390 = sand.u32 %s85, 1
          %s391 = smul.addr %s390, 8
          %s392 = scalar_lea.vmem [#allocation5], %s391
          %s393 = smul.u32 2, %s41
          %s395 = ssub.s32 128, 128
          %396 = vsyncadd %s389, %s395
          %s397 = smul.addr %s40, 2
          %s398 = sadd.s32 %s393, %s397
          %s399 = smul.addr %s398, 64
          %s400 = scalar_lea.hbm %s1, %s399
          %s402 = sshll.u32 %s392, 4
          %s403 = int_to_ptr.vmem [resolvable:$true] %s402
          %405 = dma.hbm_to_vmem [thread:$0]  %s400, 128, %s403, %s389
        $region40: #{self_sup_attention_forward.1} parent=31 // pred_fallthru
          _
      $region32: #{self_sup_attention_forward.1} parent=5 // pred_fallthru
        _
      %p406 = scmp.le.s32.totalorder 1, %s33
      %p407 = scmp.lt.s32.totalorder %s33, 3
      %p408 = pnand %p406, %p407
      %p409 = pneg %p408
      // Predicated region
      $region41: #{self_sup_attention_forward.1} parent=5 // pred_check
        _
      $region42: #{self_sup_attention_forward.1} parent=5 // pred_check_branch
        %411 = sbr.rel (%p408) target = $region44
      $region43: #{self_sup_attention_forward.1} parent=5 // pred_region
        %s412 = ssub.s32 %s33, 1
        %s413 = sand.u32 %s60, 1
        %s414 = scalar_lea.sflag [#allocation3], %s413
        %s415 = sand.u32 %s60, 1
        %s416 = smul.addr %s415, 8
        %s417 = scalar_lea.vmem [#allocation2], %s416
        // Predicated region
        $region45: #{self_sup_attention_forward.1} parent=43 // pred_check
          %p418 = pneg %p73
        $region46: #{self_sup_attention_forward.1} parent=43 // pred_check_branch
          %420 = sbr.rel (%p418) target = $region48
        $region47: #{self_sup_attention_forward.1} parent=43 // pred_region
          %421 = dma.done %s414, 128
        $region48: #{self_sup_attention_forward.1} parent=43 // pred_fallthru
          _
        %s422 = sand.u32 %s38, 1
        %s423 = scalar_lea.sflag [#allocation6], %s422
        %s424 = sand.u32 %s88, 1
        %s425 = smul.addr %s424, 8
        %s426 = scalar_lea.vmem [#allocation5], %s425
        // Predicated region
        $region49: #{self_sup_attention_forward.1} parent=43 // pred_check
          %p427 = pneg %p101
        $region50: #{self_sup_attention_forward.1} parent=43 // pred_check_branch
          %429 = sbr.rel (%p427) target = $region52
        $region51: #{self_sup_attention_forward.1} parent=43 // pred_region
          %430 = dma.done %s423, 128
        $region52: #{self_sup_attention_forward.1} parent=43 // pred_fallthru
          _
        // Predicated region
        $region53: #{self_sup_attention_forward.1} parent=43 // pred_check
          %p431 = pneg %p122
        $region54: #{self_sup_attention_forward.1} parent=43 // pred_check_branch
          %433 = sbr.rel (%p431) target = $region56
        $region55: #{self_sup_attention_forward.1} parent=43 // pred_region
          %434 = dma.done [#allocation6], 640
        $region56: #{self_sup_attention_forward.1} parent=43 // pred_fallthru
          _
        // Predicated region
        $region57: #{self_sup_attention_forward.1} parent=43 // pred_check
          %p435 = pneg %p143
        $region58: #{self_sup_attention_forward.1} parent=43 // pred_check_branch
          %437 = sbr.rel (%p435) target = $region60
        $region59: #{self_sup_attention_forward.1} parent=43 // pred_region
          %438 = dma.done [#allocation9], 640
        $region60: #{self_sup_attention_forward.1} parent=43 // pred_fallthru
          _
        // Predicated region
        $region61: #{self_sup_attention_forward.1} parent=43 // pred_check
          %p439 = pneg %p164
        $region62: #{self_sup_attention_forward.1} parent=43 // pred_check_branch
          %441 = sbr.rel (%p439) target = $region64
        $region63: #{self_sup_attention_forward.1} parent=43 // pred_region
          %442 = dma.done [#allocation9], 64
        $region64: #{self_sup_attention_forward.1} parent=43 // pred_fallthru
          _
        // Predicated region
        $region65: #{self_sup_attention_forward.1} parent=43 // pred_check
          %p443 = pneg %p185
        $region66: #{self_sup_attention_forward.1} parent=43 // pred_check_branch
          %445 = sbr.rel (%p443) target = $region68
        $region67: #{self_sup_attention_forward.1} parent=43 // pred_region
          %446 = dma.done [#allocation12], 64
        $region68: #{self_sup_attention_forward.1} parent=43 // pred_fallthru
          _
        %s447 = sand.u32 %s60, 1
        %s448 = scalar_lea.sflag [#allocation3], %s447
        %s449 = sand.u32 %s60, 1
        %s450 = smul.addr %s449, 8
        %s451 = scalar_lea.vmem [#allocation2], %s450
        %p452 = pneg %p73
        %p453 = pneg %p70
        %s454 = sand.u32 %s38, 1
        %s455 = scalar_lea.sflag [#allocation6], %s454
        %s456 = sand.u32 %s88, 1
        %s457 = smul.addr %s456, 8
        %s458 = scalar_lea.vmem [#allocation5], %s457
        %p459 = pneg %p101
        %p460 = pneg %p98
        %p461 = pneg %p122
        %p462 = pneg %p119
        %p463 = pneg %p143
        %p464 = pneg %p140
        %p465 = pneg %p164
        %p466 = pneg %p161
        %p467 = pneg %p185
        %p468 = pneg %p182
        %p469 = pneg %p213
        %p470 = pneg %p210
        %s471 = sand.u32 %s200, 1
        %s472 = scalar_lea.sflag [#allocation4], %s471
        %s473 = sand.u32 %s200, 1
        %s474 = smul.addr %s473, 8
        %s475 = scalar_lea.vmem [#allocation13], %s474
        %p476 = pneg %p241
        %p477 = pneg %p238
        %s478 = sand.u32 %s38, 1
        %s479 = scalar_lea.sflag [#allocation15], %s478
        %s480 = sand.u32 %s228, 1
        %s481 = smul.addr %s480, 8
        %s482 = scalar_lea.vmem [#allocation14], %s481
        %p483 = pneg %p269
        %p484 = pneg %p266
        %s485 = sand.u32 %s38, 1
        %s486 = scalar_lea.sflag [#allocation15], %s485
        %s487 = sand.u32 %s256, 1
        %s488 = smul.addr %s487, 8
        %s489 = scalar_lea.vmem [#allocation16], %s488
        %p490 = pneg %p297
        %p491 = pneg %p294
        %s492 = sand.u32 %s284, 1
        %s493 = scalar_lea.sflag [#allocation18], %s492
        %s494 = sand.u32 %s284, 1
        %s495 = smul.addr %s494, 8
        %s496 = scalar_lea.vmem [#allocation17], %s495
        %s497 = smul.u32 2, %s43
        %s498 = smul.u32 2, %s43
        %s499 = smul.u32 2, %s43
        %s500 = smul.u32 2, %s43
        %s501 = smul.u32 2, %s43
        %s502 = smul.u32 2, %s43
        %v503 = vld [vmem:[%s417] sm:$0xff]
        %v504 = vld [vmem:[%s426] sm:$0xff]
        %v505 = vld [vmem:[#allocation7] sm:$0xff]
        %v506 = vld [vmem:[#allocation7 + $0x8] sm:$0xff]
        %v507 = vld [vmem:[#allocation7 + $0x10] sm:$0xff]
        %v508 = vld [vmem:[#allocation7 + $0x18] sm:$0xff]
        %v509 = vld [vmem:[#allocation7 + $0x20] sm:$0xf]
        %v510 = vld [vmem:[#allocation8] sm:$0xff]
        %v511 = vld [vmem:[#allocation8 + $0x8] sm:$0xff]
        %v512 = vld [vmem:[#allocation8 + $0x10] sm:$0xff]
        %v513 = vld [vmem:[#allocation8 + $0x18] sm:$0xff]
        %v514 = vld [vmem:[#allocation8 + $0x20] sm:$0xf]
        %v515 = vld [vmem:[#allocation10] sm:$0xf]
        %v516 = vld [vmem:[#allocation11] sm:$0xf]
        %518 = vset.pattern.permute.xlu0 0
        %519 = vperm.xlu0 %518, %v510
        %v520 = vpop.permute.xlu0 %519
        %523 = vset.pattern.permute.xlu0 0
        %524 = vperm.xlu0 %523, %v511
        %v525 = vpop.permute.xlu0 %524
        %528 = vset.pattern.permute.xlu0 0
        %529 = vperm.xlu0 %528, %v512
        %v530 = vpop.permute.xlu0 %529
        %533 = vset.pattern.permute.xlu0 0
        %534 = vperm.xlu0 %533, %v513
        %v535 = vpop.permute.xlu0 %534
        %538 = vset.pattern.permute.xlu0 0
        %539 = vperm.xlu0 %538, %v514
        %v540 = vpop.permute.xlu0 %539
        %v543 = vcombine.high %v503, %v503
        %vm544 = vcmask 31744
        %v546 = vsel %vm544, %v505, 0
        %v549 = vsel %vm544, %v506, 0
        %v552 = vsel %vm544, %v507, 0
        %v555 = vsel %vm544, %v508, 0
        %v558 = vsel %vm544, %v509, 0
        %vm560 = vcmask 1043456
        %v561 = vsel %vm560, %v503, 0
        %v563 = vsel %vm560, %v543, 0
        %565 = vmatprep.subr.mxu0 %v563
        %566 = vmatpush1.msra.mxu0 %v561
        %567 = vmatprep.subr.mxu0 0.0
        %568 = vmatpush1.msra.mxu0 0.0
        %569 = vmatprep.subr.mxu0 0.0
        %570 = vmatpush1.msra.mxu0 0.0
        %571 = vmatprep.subr.mxu0 0.0
        %572 = vmatpush1.msra.mxu0 0.0
        %573 = vmatprep.subr.mxu0 0.0
        %574 = vmatpush1.msra.mxu0 0.0
        %575 = vmatprep.subr.mxu0 0.0
        %576 = vmatpush1.msra.mxu0 0.0
        %577 = vmatprep.subr.mxu0 0.0
        %578 = vmatpush1.msra.mxu0 0.0
        %579 = vmatprep.subr.mxu0 0.0
        %580 = vmatpush1.msra.mxu0 0.0
        %581 = vmatprep.subr.mxu0 0.0
        %582 = vmatpush1.msra.mxu0 0.0
        %583 = vmatprep.subr.mxu0 0.0
        %584 = vmatpush1.msra.mxu0 0.0
        %585 = vmatprep.subr.mxu0 0.0
        %586 = vmatpush1.msra.mxu0 0.0
        %587 = vmatprep.subr.mxu0 0.0
        %588 = vmatpush1.msra.mxu0 0.0
        %589 = vmatprep.subr.mxu0 0.0
        %590 = vmatpush1.msra.mxu0 0.0
        %591 = vmatprep.subr.mxu0 0.0
        %592 = vmatpush1.msra.mxu0 0.0
        %593 = vmatprep.subr.mxu0 0.0
        %594 = vmatpush1.msra.mxu0 0.0
        %595 = vmatprep.subr.mxu0 0.0
        %596 = vmatpush1.msra.mxu0 0.0
        %597 = vmatprep.subr.mxu0 0.0
        %598 = vmatpush1.msra.mxu0 0.0
        %599 = vmatprep.subr.mxu0 0.0
        %600 = vmatpush1.msra.mxu0 0.0
        %601 = vmatprep.subr.mxu0 0.0
        %602 = vmatpush1.msra.mxu0 0.0
        %603 = vmatprep.subr.mxu0 0.0
        %604 = vmatpush1.msra.mxu0 0.0
        %605 = vmatprep.subr.mxu0 0.0
        %606 = vmatpush1.msra.mxu0 0.0
        %607 = vmatprep.subr.mxu0 0.0
        %608 = vmatpush1.msra.mxu0 0.0
        %609 = vmatprep.subr.mxu0 0.0
        %610 = vmatpush1.msra.mxu0 0.0
        %611 = vmatprep.subr.mxu0 0.0
        %612 = vmatpush1.msra.mxu0 0.0
        %613 = vmatprep.subr.mxu0 0.0
        %614 = vmatpush1.msra.mxu0 0.0
        %615 = vmatprep.subr.mxu0 0.0
        %616 = vmatpush1.msra.mxu0 0.0
        %617 = vmatprep.subr.mxu0 0.0
        %618 = vmatpush1.msra.mxu0 0.0
        %619 = vmatprep.subr.mxu0 0.0
        %620 = vmatpush1.msra.mxu0 0.0
        %621 = vmatprep.subr.mxu0 0.0
        %622 = vmatpush1.msra.mxu0 0.0
        %623 = vmatprep.subr.mxu0 0.0
        %624 = vmatpush1.msra.mxu0 0.0
        %625 = vmatprep.subr.mxu0 0.0
        %626 = vmatpush1.msra.mxu0 0.0
        %627 = vmatprep.subr.mxu0 0.0
        %628 = vmatpush1.msra.mxu0 0.0
        %629 = vmatprep.mubr.f32.mxu0 0.0
        %630 = vmatmul.mubr.f32.gmra.mrb[0].mxu0 %v546
        %v631 = vpop.f32.mrb[0].mxu0
        %v632 = vadd.f32 %v520, %v631
        %v633 = vpop.f32.mrb[0].mxu0
        %v634 = vadd.f32 %v520, %v633
        %635 = vmatprep.mubr.f32.mxu0 0.0
        %636 = vmatmul.mubr.f32.gmra.mrb[0].mxu0 %v549
        %v637 = vpop.f32.mrb[0].mxu0
        %v638 = vadd.f32 %v525, %v637
        %v639 = vpop.f32.mrb[0].mxu0
        %v640 = vadd.f32 %v525, %v639
        %641 = vmatprep.mubr.f32.mxu0 0.0
        %642 = vmatmul.mubr.f32.gmra.mrb[0].mxu0 %v552
        %v643 = vpop.f32.mrb[0].mxu0
        %v644 = vadd.f32 %v530, %v643
        %v645 = vpop.f32.mrb[0].mxu0
        %v646 = vadd.f32 %v530, %v645
        %647 = vmatprep.mubr.f32.mxu0 0.0
        %648 = vmatmul.mubr.f32.gmra.mrb[0].mxu0 %v555
        %v649 = vpop.f32.mrb[0].mxu0
        %v650 = vadd.f32 %v535, %v649
        %v651 = vpop.f32.mrb[0].mxu0
        %v652 = vadd.f32 %v535, %v651
        %653 = vmatprep.mubr.f32.mxu0 0.0
        %654 = vmatmul.mubr.f32.gmra.mrb[0].mxu0 %v558
        %v655 = vpop.f32.mrb[0].mxu0
        %v656 = vadd.f32 %v540, %v655
        %v657 = vpop.f32.mrb[0].mxu0
        %v658 = vadd.f32 %v540, %v657
        %659 = vdwg.mxu0
        %v660 = vmax.f32 %v632, 0.0
        %v661 = vmax.f32 %v634, 0.0
        %v662 = vmax.f32 %v638, 0.0
        %v663 = vmax.f32 %v640, 0.0
        %v664 = vmax.f32 %v644, 0.0
        %v665 = vmax.f32 %v646, 0.0
        %v666 = vmax.f32 %v650, 0.0
        %v667 = vmax.f32 %v652, 0.0
        %v669 = vcombine.high %v504, %v504
        %v670 = vsel %vm560, %v504, 0
        %v672 = vsel %vm560, %v669, 0
        %674 = vmatprep.subr.mxu0 %v672
        %675 = vmatpush1.msra.mxu0 %v670
        %676 = vmatprep.subr.mxu0 0.0
        %677 = vmatpush1.msra.mxu0 0.0
        %678 = vmatprep.subr.mxu0 0.0
        %679 = vmatpush1.msra.mxu0 0.0
        %680 = vmatprep.subr.mxu0 0.0
        %681 = vmatpush1.msra.mxu0 0.0
        %682 = vmatprep.subr.mxu0 0.0
        %683 = vmatpush1.msra.mxu0 0.0
        %684 = vmatprep.subr.mxu0 0.0
        %685 = vmatpush1.msra.mxu0 0.0
        %686 = vmatprep.subr.mxu0 0.0
        %687 = vmatpush1.msra.mxu0 0.0
        %688 = vmatprep.subr.mxu0 0.0
        %689 = vmatpush1.msra.mxu0 0.0
        %690 = vmatprep.subr.mxu0 0.0
        %691 = vmatpush1.msra.mxu0 0.0
        %692 = vmatprep.subr.mxu0 0.0
        %693 = vmatpush1.msra.mxu0 0.0
        %694 = vmatprep.subr.mxu0 0.0
        %695 = vmatpush1.msra.mxu0 0.0
        %696 = vmatprep.subr.mxu0 0.0
        %697 = vmatpush1.msra.mxu0 0.0
        %698 = vmatprep.subr.mxu0 0.0
        %699 = vmatpush1.msra.mxu0 0.0
        %700 = vmatprep.subr.mxu0 0.0
        %701 = vmatpush1.msra.mxu0 0.0
        %702 = vmatprep.subr.mxu0 0.0
        %703 = vmatpush1.msra.mxu0 0.0
        %704 = vmatprep.subr.mxu0 0.0
        %705 = vmatpush1.msra.mxu0 0.0
        %706 = vmatprep.subr.mxu0 0.0
        %707 = vmatpush1.msra.mxu0 0.0
        %708 = vmatprep.subr.mxu0 0.0
        %709 = vmatpush1.msra.mxu0 0.0
        %710 = vmatprep.subr.mxu0 0.0
        %711 = vmatpush1.msra.mxu0 0.0
        %712 = vmatprep.subr.mxu0 0.0
        %713 = vmatpush1.msra.mxu0 0.0
        %714 = vmatprep.subr.mxu0 0.0
        %715 = vmatpush1.msra.mxu0 0.0
        %716 = vmatprep.subr.mxu0 0.0
        %717 = vmatpush1.msra.mxu0 0.0
        %718 = vmatprep.subr.mxu0 0.0
        %719 = vmatpush1.msra.mxu0 0.0
        %720 = vmatprep.subr.mxu0 0.0
        %721 = vmatpush1.msra.mxu0 0.0
        %722 = vmatprep.subr.mxu0 0.0
        %723 = vmatpush1.msra.mxu0 0.0
        %724 = vmatprep.subr.mxu0 0.0
        %725 = vmatpush1.msra.mxu0 0.0
        %726 = vmatprep.subr.mxu0 0.0
        %727 = vmatpush1.msra.mxu0 0.0
        %728 = vmatprep.subr.mxu0 0.0
        %729 = vmatpush1.msra.mxu0 0.0
        %730 = vmatprep.subr.mxu0 0.0
        %731 = vmatpush1.msra.mxu0 0.0
        %732 = vmatprep.subr.mxu0 0.0
        %733 = vmatpush1.msra.mxu0 0.0
        %734 = vmatprep.subr.mxu0 0.0
        %735 = vmatpush1.msra.mxu0 0.0
        %736 = vmatprep.subr.mxu0 0.0
        %737 = vmatpush1.msra.mxu0 0.0
        %738 = vmatprep.mubr.f32.mxu0 0.0
        %739 = vmatmul.mubr.f32.gmra.mrb[0].mxu0 %v546
        %v740 = vpop.f32.mrb[0].mxu0
        %v741 = vadd.f32 %v520, %v740
        %v742 = vpop.f32.mrb[0].mxu0
        %v743 = vadd.f32 %v520, %v742
        %744 = vmatprep.mubr.f32.mxu0 0.0
        %745 = vmatmul.mubr.f32.gmra.mrb[0].mxu0 %v549
        %v746 = vpop.f32.mrb[0].mxu0
        %v747 = vadd.f32 %v525, %v746
        %v748 = vpop.f32.mrb[0].mxu0
        %v749 = vadd.f32 %v525, %v748
        %750 = vmatprep.mubr.f32.mxu0 0.0
        %751 = vmatmul.mubr.f32.gmra.mrb[0].mxu0 %v552
        %v752 = vpop.f32.mrb[0].mxu0
        %v753 = vadd.f32 %v530, %v752
        %v754 = vpop.f32.mrb[0].mxu0
        %v755 = vadd.f32 %v530, %v754
        %756 = vmatprep.mubr.f32.mxu0 0.0
        %757 = vmatmul.mubr.f32.gmra.mrb[0].mxu0 %v555
        %v758 = vpop.f32.mrb[0].mxu0
        %v759 = vadd.f32 %v535, %v758
        %v760 = vpop.f32.mrb[0].mxu0
        %v761 = vadd.f32 %v535, %v760
        %762 = vmatprep.mubr.f32.mxu0 0.0
        %763 = vmatmul.mubr.f32.gmra.mrb[0].mxu0 %v558
        %v764 = vpop.f32.mrb[0].mxu0
        %v765 = vadd.f32 %v540, %v764
        %v766 = vpop.f32.mrb[0].mxu0
        %v767 = vadd.f32 %v540, %v766
        %768 = vdwg.mxu0
        %v769 = vmax.f32 %v741, 0.0
        %v770 = vmax.f32 %v743, 0.0
        %v771 = vmax.f32 %v747, 0.0
        %v772 = vmax.f32 %v749, 0.0
        %v773 = vmax.f32 %v753, 0.0
        %v774 = vmax.f32 %v755, 0.0
        %v775 = vmax.f32 %v759, 0.0
        %v776 = vmax.f32 %v761, 0.0
        %v777 = vxor.u32 %v656, 2147483648
        %v778 = vxor.u32 %v658, 2147483648
        %v779 = vmul.f32 %v777, 1.442695
        %v780 = vpow.pop %v779
        %v781 = vmul.f32 %v778, 1.442695
        %v782 = vpow.pop %v781
        %v783 = vadd.f32 %v780, 1.0
        %v784 = vadd.f32 %v782, 1.0
        %v785 = vrcp.pop %v783
        %v786 = vmul.f32 1.0, %v785
        %v787 = vrcp.pop %v784
        %v788 = vmul.f32 1.0, %v787
        %v789 = vxor.u32 %v765, 2147483648
        %v790 = vxor.u32 %v767, 2147483648
        %v791 = vmul.f32 %v789, 1.442695
        %v792 = vpow.pop %v791
        %v793 = vmul.f32 %v790, 1.442695
        %v794 = vpow.pop %v793
        %v795 = vadd.f32 %v792, 1.0
        %v796 = vadd.f32 %v794, 1.0
        %v797 = vrcp.pop %v795
        %v798 = vmul.f32 1.0, %v797
        %v799 = vrcp.pop %v796
        %v800 = vmul.f32 1.0, %v799
        %v801 = vsub.f32 1.0, %v786
        %v802 = vsub.f32 1.0, %v788
        %v803 = vsub.f32 1.0, %v798
        %v804 = vsub.f32 1.0, %v800
        %v805 = vmul.f32 %v801, %v803
        %v806 = vmul.f32 %v802, %v804
        %v809 = vrot.slane %v805, 1
        %v810 = vrot.slane %v806, 1
        %v813 = vmul.f32 %v798, %v809
        %v814 = vmul.f32 %v800, %v810
        %v817 = vrot.slane %v813, 7
        %v818 = vrot.slane %v814, 7
        %v821 = vadd.f32 %v798, %v817
        %v822 = vadd.f32 %v800, %v818
        %v823 = vrot.slane %v805, 7
        %v824 = vrot.slane %v806, 7
        %v827 = vmul.f32 %v805, %v823
        %v828 = vmul.f32 %v806, %v824
        %v831 = vrot.slane %v827, 2
        %v832 = vrot.slane %v828, 2
        %v835 = vmul.f32 %v798, %v831
        %v836 = vmul.f32 %v800, %v832
        %v839 = vrot.slane %v835, 6
        %v840 = vrot.slane %v836, 6
        %v843 = vadd.f32 %v821, %v839
        %v844 = vadd.f32 %v822, %v840
        %v845 = vrot.slane %v805, 6
        %v846 = vrot.slane %v806, 6
        %v849 = vmul.f32 %v827, %v845
        %v850 = vmul.f32 %v828, %v846
        %v853 = vrot.slane %v849, 3
        %v854 = vrot.slane %v850, 3
        %v857 = vmul.f32 %v798, %v853
        %v858 = vmul.f32 %v800, %v854
        %v861 = vrot.slane %v857, 5
        %v862 = vrot.slane %v858, 5
        %v865 = vadd.f32 %v843, %v861
        %v866 = vadd.f32 %v844, %v862
        %v867 = vrot.slane %v805, 5
        %v868 = vrot.slane %v806, 5
        %v871 = vmul.f32 %v849, %v867
        %v872 = vmul.f32 %v850, %v868
        %v873 = vlaneseq
        %v874 = vshrl.u32 %v873, 7
        %v875 = vsub.s32 3, %v874
        %v876 = vrot.slane %v871, %v875
        %v877 = vlaneseq
        %v878 = vshrl.u32 %v877, 7
        %v879 = vsub.s32 3, %v878
        %v880 = vrot.slane %v872, %v879
        %v881 = vmul.f32 %v876, %v660
        %v882 = vmul.f32 %v880, %v661
        %v883 = vmul.f32 %v876, %v662
        %v884 = vmul.f32 %v880, %v663
        %v885 = vmul.f32 %v876, %v664
        %v886 = vmul.f32 %v880, %v665
        %v887 = vmul.f32 %v876, %v666
        %v888 = vmul.f32 %v880, %v667
        %v889 = vlaneseq
        %v890 = vshrl.u32 %v889, 7
        %v891 = vsub.s32 3, %v890
        %v892 = vrot.slane %v865, %v891
        %v893 = vlaneseq
        %v894 = vshrl.u32 %v893, 7
        %v895 = vsub.s32 3, %v894
        %v896 = vrot.slane %v866, %v895
        %v897 = vmul.f32 %v892, %v769
        %v898 = vmul.f32 %v896, %v770
        %v899 = vmul.f32 %v892, %v771
        %v900 = vmul.f32 %v896, %v772
        %v901 = vmul.f32 %v892, %v773
        %v902 = vmul.f32 %v896, %v774
        %v903 = vmul.f32 %v892, %v775
        %v904 = vmul.f32 %v896, %v776
        %v905 = vadd.f32 %v881, %v897
        %v906 = vadd.f32 %v882, %v898
        %v907 = vadd.f32 %v883, %v899
        %v908 = vadd.f32 %v884, %v900
        %v909 = vadd.f32 %v885, %v901
        %v910 = vadd.f32 %v886, %v902
        %v911 = vadd.f32 %v887, %v903
        %v912 = vadd.f32 %v888, %v904
        %v913 = vlaneseq
        %v914 = vshrl.u32 %v913, 7
        %v915 = vsub.s32 3, %v914
        %v916 = vrot.slane %v798, %v915
        %v917 = vlaneseq
        %v918 = vshrl.u32 %v917, 7
        %v919 = vsub.s32 3, %v918
        %v920 = vrot.slane %v800, %v919
        %v921 = vmul.f32 %v916, %v769
        %v922 = vmul.f32 %v920, %v770
        %v923 = vmul.f32 %v916, %v771
        %v924 = vmul.f32 %v920, %v772
        %v925 = vmul.f32 %v916, %v773
        %v926 = vmul.f32 %v920, %v774
        %v927 = vmul.f32 %v916, %v775
        %v928 = vmul.f32 %v920, %v776
        %930 = vset.pattern.permute.xlu0 0
        %931 = vperm.xlu0 %930, %v516
        %v932 = vpop.permute.xlu0 %931
        %vm934 = vcmask 261120
        %v936 = vsel %vm934, %v515, 0
        %938 = vmatprep.subr.mxu0 %v906
        %939 = vmatpush1.msra.mxu0 %v905
        %940 = vmatprep.subr.mxu0 %v908
        %941 = vmatpush1.msra.mxu0 %v907
        %942 = vmatprep.subr.mxu0 %v910
        %943 = vmatpush1.msra.mxu0 %v909
        %944 = vmatprep.subr.mxu0 %v912
        %945 = vmatpush1.msra.mxu0 %v911
        %946 = vmatprep.subr.mxu0 0.0
        %947 = vmatpush1.msra.mxu0 0.0
        %948 = vmatprep.subr.mxu0 0.0
        %949 = vmatpush1.msra.mxu0 0.0
        %950 = vmatprep.subr.mxu0 0.0
        %951 = vmatpush1.msra.mxu0 0.0
        %952 = vmatprep.subr.mxu0 0.0
        %953 = vmatpush1.msra.mxu0 0.0
        %954 = vmatprep.subr.mxu0 0.0
        %955 = vmatpush1.msra.mxu0 0.0
        %956 = vmatprep.subr.mxu0 0.0
        %957 = vmatpush1.msra.mxu0 0.0
        %958 = vmatprep.subr.mxu0 0.0
        %959 = vmatpush1.msra.mxu0 0.0
        %960 = vmatprep.subr.mxu0 0.0
        %961 = vmatpush1.msra.mxu0 0.0
        %962 = vmatprep.subr.mxu0 0.0
        %963 = vmatpush1.msra.mxu0 0.0
        %964 = vmatprep.subr.mxu0 0.0
        %965 = vmatpush1.msra.mxu0 0.0
        %966 = vmatprep.subr.mxu0 0.0
        %967 = vmatpush1.msra.mxu0 0.0
        %968 = vmatprep.subr.mxu0 0.0
        %969 = vmatpush1.msra.mxu0 0.0
        %970 = vmatprep.subr.mxu0 0.0
        %971 = vmatpush1.msra.mxu0 0.0
        %972 = vmatprep.subr.mxu0 0.0
        %973 = vmatpush1.msra.mxu0 0.0
        %974 = vmatprep.subr.mxu0 0.0
        %975 = vmatpush1.msra.mxu0 0.0
        %976 = vmatprep.subr.mxu0 0.0
        %977 = vmatpush1.msra.mxu0 0.0
        %978 = vmatprep.subr.mxu0 0.0
        %979 = vmatpush1.msra.mxu0 0.0
        %980 = vmatprep.subr.mxu0 0.0
        %981 = vmatpush1.msra.mxu0 0.0
        %982 = vmatprep.subr.mxu0 0.0
        %983 = vmatpush1.msra.mxu0 0.0
        %984 = vmatprep.subr.mxu0 0.0
        %985 = vmatpush1.msra.mxu0 0.0
        %986 = vmatprep.subr.mxu0 0.0
        %987 = vmatpush1.msra.mxu0 0.0
        %988 = vmatprep.subr.mxu0 0.0
        %989 = vmatpush1.msra.mxu0 0.0
        %990 = vmatprep.subr.mxu0 0.0
        %991 = vmatpush1.msra.mxu0 0.0
        %992 = vmatprep.subr.mxu0 0.0
        %993 = vmatpush1.msra.mxu0 0.0
        %994 = vmatprep.subr.mxu0 0.0
        %995 = vmatpush1.msra.mxu0 0.0
        %996 = vmatprep.subr.mxu0 0.0
        %997 = vmatpush1.msra.mxu0 0.0
        %998 = vmatprep.subr.mxu0 0.0
        %999 = vmatpush1.msra.mxu0 0.0
        %1000 = vmatprep.subr.mxu0 0.0
        %1001 = vmatpush1.msra.mxu0 0.0
        %1002 = vmatprep.mubr.f32.mxu0 0.0
        %1003 = vmatmul.mubr.f32.gmra.mrb[0].mxu0 %v936
        %v1004 = vpop.f32.mrb[0].mxu0
        %v1005 = vadd.f32 %v932, %v1004
        %v1006 = vpop.f32.mrb[0].mxu0
        %v1007 = vadd.f32 %v932, %v1006
        %1008 = vdwg.mxu0
        %v1011 = vcombine.low %v1005, %v1007
        %1013 = vst [vmem:[%s475] sm:$0xff] %v1011
        %1014 = vmatprep.subr.mxu0 %v922
        %1015 = vmatpush1.msra.mxu0 %v921
        %1016 = vmatprep.subr.mxu0 %v924
        %1017 = vmatpush1.msra.mxu0 %v923
        %1018 = vmatprep.subr.mxu0 %v926
        %1019 = vmatpush1.msra.mxu0 %v925
        %1020 = vmatprep.subr.mxu0 %v928
        %1021 = vmatpush1.msra.mxu0 %v927
        %1022 = vmatprep.subr.mxu0 0.0
        %1023 = vmatpush1.msra.mxu0 0.0
        %1024 = vmatprep.subr.mxu0 0.0
        %1025 = vmatpush1.msra.mxu0 0.0
        %1026 = vmatprep.subr.mxu0 0.0
        %1027 = vmatpush1.msra.mxu0 0.0
        %1028 = vmatprep.subr.mxu0 0.0
        %1029 = vmatpush1.msra.mxu0 0.0
        %1030 = vmatprep.subr.mxu0 0.0
        %1031 = vmatpush1.msra.mxu0 0.0
        %1032 = vmatprep.subr.mxu0 0.0
        %1033 = vmatpush1.msra.mxu0 0.0
        %1034 = vmatprep.subr.mxu0 0.0
        %1035 = vmatpush1.msra.mxu0 0.0
        %1036 = vmatprep.subr.mxu0 0.0
        %1037 = vmatpush1.msra.mxu0 0.0
        %1038 = vmatprep.subr.mxu0 0.0
        %1039 = vmatpush1.msra.mxu0 0.0
        %1040 = vmatprep.subr.mxu0 0.0
        %1041 = vmatpush1.msra.mxu0 0.0
        %1042 = vmatprep.subr.mxu0 0.0
        %1043 = vmatpush1.msra.mxu0 0.0
        %1044 = vmatprep.subr.mxu0 0.0
        %1045 = vmatpush1.msra.mxu0 0.0
        %1046 = vmatprep.subr.mxu0 0.0
        %1047 = vmatpush1.msra.mxu0 0.0
        %1048 = vmatprep.subr.mxu0 0.0
        %1049 = vmatpush1.msra.mxu0 0.0
        %1050 = vmatprep.subr.mxu0 0.0
        %1051 = vmatpush1.msra.mxu0 0.0
        %1052 = vmatprep.subr.mxu0 0.0
        %1053 = vmatpush1.msra.mxu0 0.0
        %1054 = vmatprep.subr.mxu0 0.0
        %1055 = vmatpush1.msra.mxu0 0.0
        %1056 = vmatprep.subr.mxu0 0.0
        %1057 = vmatpush1.msra.mxu0 0.0
        %1058 = vmatprep.subr.mxu0 0.0
        %1059 = vmatpush1.msra.mxu0 0.0
        %1060 = vmatprep.subr.mxu0 0.0
        %1061 = vmatpush1.msra.mxu0 0.0
        %1062 = vmatprep.subr.mxu0 0.0
        %1063 = vmatpush1.msra.mxu0 0.0
        %1064 = vmatprep.subr.mxu0 0.0
        %1065 = vmatpush1.msra.mxu0 0.0
        %1066 = vmatprep.subr.mxu0 0.0
        %1067 = vmatpush1.msra.mxu0 0.0
        %1068 = vmatprep.subr.mxu0 0.0
        %1069 = vmatpush1.msra.mxu0 0.0
        %1070 = vmatprep.subr.mxu0 0.0
        %1071 = vmatpush1.msra.mxu0 0.0
        %1072 = vmatprep.subr.mxu0 0.0
        %1073 = vmatpush1.msra.mxu0 0.0
        %1074 = vmatprep.subr.mxu0 0.0
        %1075 = vmatpush1.msra.mxu0 0.0
        %1076 = vmatprep.subr.mxu0 0.0
        %1077 = vmatpush1.msra.mxu0 0.0
        %1078 = vmatprep.mubr.f32.mxu0 0.0
        %1079 = vmatmul.mubr.f32.gmra.mrb[0].mxu0 %v936
        %v1080 = vpop.f32.mrb[0].mxu0
        %v1081 = vadd.f32 %v932, %v1080
        %v1082 = vpop.f32.mrb[0].mxu0
        %v1083 = vadd.f32 %v932, %v1082
        %1084 = vdwg.mxu0
        %v1087 = vcombine.low %v1081, %v1083
        %1089 = vst [vmem:[%s482] sm:$0xff] %v1087
        %v1092 = vcombine.low %v765, %v767
        %1094 = vst [vmem:[%s489] sm:$0xff] %v1092
        %v1097 = vcombine.low %v786, %v788
        %1099 = vst [vmem:[%s496] sm:$0xff] %v1097
        %s1100 = sand.u32 %s200, 1
        %s1101 = scalar_lea.sflag [#allocation4], %s1100
        %s1102 = sand.u32 %s200, 1
        %s1103 = smul.addr %s1102, 8
        %s1104 = scalar_lea.vmem [#allocation13], %s1103
        %s1105 = sand.u32 %s38, 1
        %s1106 = scalar_lea.sflag [#allocation15], %s1105
        %s1107 = sand.u32 %s228, 1
        %s1108 = smul.addr %s1107, 8
        %s1109 = scalar_lea.vmem [#allocation14], %s1108
        %s1110 = sand.u32 %s38, 1
        %s1111 = scalar_lea.sflag [#allocation15], %s1110
        %s1112 = sand.u32 %s256, 1
        %s1113 = smul.addr %s1112, 8
        %s1114 = scalar_lea.vmem [#allocation16], %s1113
        %s1115 = sand.u32 %s284, 1
        %s1116 = scalar_lea.sflag [#allocation18], %s1115
        %s1117 = sand.u32 %s284, 1
        %s1118 = smul.addr %s1117, 8
        %s1119 = scalar_lea.vmem [#allocation17], %s1118
        // Predicated region
        $region69: #{self_sup_attention_forward.1} parent=43 // pred_check
          %p1120 = pneg %p210
        $region70: #{self_sup_attention_forward.1} parent=43 // pred_check_branch
          %1122 = sbr.rel (%p1120) target = $region72
        $region71: #{self_sup_attention_forward.1} parent=43 // pred_region
          %s1123 = smul.u32 2, %s43
          %s1125 = ssub.s32 128, 128
          %1126 = vsyncadd %s1101, %s1125
          %s1127 = smul.addr %s42, 2
          %s1128 = sadd.s32 %s1123, %s1127
          %s1129 = smul.addr %s1128, 64
          %s1130 = scalar_lea.hbm %s6, %s1129
          %s1132 = sshll.u32 %s1104, 4
          %s1133 = int_to_ptr.vmem [resolvable:$true] %s1132
          %1135 = dma.vmem_to_hbm [thread:$0]  %s1133, 128, %s1130, %s1101
        $region72: #{self_sup_attention_forward.1} parent=43 // pred_fallthru
          _
        // Predicated region
        $region73: #{self_sup_attention_forward.1} parent=43 // pred_check
          %p1136 = pneg %p238
        $region74: #{self_sup_attention_forward.1} parent=43 // pred_check_branch
          %1138 = sbr.rel (%p1136) target = $region76
        $region75: #{self_sup_attention_forward.1} parent=43 // pred_region
          %s1139 = smul.u32 2, %s43
          %s1141 = ssub.s32 128, 128
          %1142 = vsyncadd %s1106, %s1141
          %s1143 = smul.addr %s42, 2
          %s1144 = sadd.s32 %s1139, %s1143
          %s1145 = smul.addr %s1144, 64
          %s1146 = scalar_lea.hbm %s7, %s1145
          %s1148 = sshll.u32 %s1109, 4
          %s1149 = int_to_ptr.vmem [resolvable:$true] %s1148
          %1151 = dma.vmem_to_hbm [thread:$0]  %s1149, 128, %s1146, %s1106
        $region76: #{self_sup_attention_forward.1} parent=43 // pred_fallthru
          _
        // Predicated region
        $region77: #{self_sup_attention_forward.1} parent=43 // pred_check
          %p1152 = pneg %p266
        $region78: #{self_sup_attention_forward.1} parent=43 // pred_check_branch
          %1154 = sbr.rel (%p1152) target = $region80
        $region79: #{self_sup_attention_forward.1} parent=43 // pred_region
          %s1155 = smul.u32 2, %s43
          %s1157 = ssub.s32 128, 128
          %1158 = vsyncadd %s1111, %s1157
          %s1159 = smul.addr %s42, 2
          %s1160 = sadd.s32 %s1155, %s1159
          %s1161 = smul.addr %s1160, 64
          %s1162 = scalar_lea.hbm %s8, %s1161
          %s1164 = sshll.u32 %s1114, 4
          %s1165 = int_to_ptr.vmem [resolvable:$true] %s1164
          %1167 = dma.vmem_to_hbm [thread:$0]  %s1165, 128, %s1162, %s1111
        $region80: #{self_sup_attention_forward.1} parent=43 // pred_fallthru
          _
        // Predicated region
        $region81: #{self_sup_attention_forward.1} parent=43 // pred_check
          %p1168 = pneg %p294
        $region82: #{self_sup_attention_forward.1} parent=43 // pred_check_branch
          %1170 = sbr.rel (%p1168) target = $region84
        $region83: #{self_sup_attention_forward.1} parent=43 // pred_region
          %s1171 = smul.u32 2, %s43
          %s1173 = ssub.s32 128, 128
          %1174 = vsyncadd %s1116, %s1173
          %s1175 = smul.addr %s42, 2
          %s1176 = sadd.s32 %s1171, %s1175
          %s1177 = smul.addr %s1176, 64
          %s1178 = scalar_lea.hbm %s9, %s1177
          %s1180 = sshll.u32 %s1119, 4
          %s1181 = int_to_ptr.vmem [resolvable:$true] %s1180
          %1183 = dma.vmem_to_hbm [thread:$0]  %s1181, 128, %s1178, %s1116
        $region84: #{self_sup_attention_forward.1} parent=43 // pred_fallthru
          _
      $region44: #{self_sup_attention_forward.1} parent=5 // pred_fallthru
        _
      %p1184 = scmp.le.s32.totalorder 2, %s33
      // Predicated region
      $region85: #{self_sup_attention_forward.1} parent=5 // pred_check
        %p1185 = pneg %p1184
      $region86: #{self_sup_attention_forward.1} parent=5 // pred_check_branch
        %1187 = sbr.rel (%p1185) target = $region88
      $region87: #{self_sup_attention_forward.1} parent=5 // pred_region
        %s1188 = ssub.s32 %s33, 2
        // Predicated region
        $region89: #{self_sup_attention_forward.1} parent=87 // pred_check
          %p1189 = pneg %p216
        $region90: #{self_sup_attention_forward.1} parent=87 // pred_check_branch
          %1191 = sbr.rel (%p1189) target = $region92
        $region91: #{self_sup_attention_forward.1} parent=87 // pred_region
          %s1192 = sand.u32 %s201, 1
          %s1193 = scalar_lea.sflag [#allocation4], %s1192
          %s1194 = sand.u32 %s201, 1
          %s1195 = smul.addr %s1194, 8
          %s1196 = scalar_lea.vmem [#allocation13], %s1195
          %1197 = dma.done %s1193, 128
        $region92: #{self_sup_attention_forward.1} parent=87 // pred_fallthru
          _
        // Predicated region
        $region93: #{self_sup_attention_forward.1} parent=87 // pred_check
          %p1198 = pneg %p244
        $region94: #{self_sup_attention_forward.1} parent=87 // pred_check_branch
          %1200 = sbr.rel (%p1198) target = $region96
        $region95: #{self_sup_attention_forward.1} parent=87 // pred_region
          %s1201 = sand.u32 %s39, 1
          %s1202 = scalar_lea.sflag [#allocation15], %s1201
          %s1203 = sand.u32 %s229, 1
          %s1204 = smul.addr %s1203, 8
          %s1205 = scalar_lea.vmem [#allocation14], %s1204
          %1206 = dma.done %s1202, 128
        $region96: #{self_sup_attention_forward.1} parent=87 // pred_fallthru
          _
        // Predicated region
        $region97: #{self_sup_attention_forward.1} parent=87 // pred_check
          %p1207 = pneg %p272
        $region98: #{self_sup_attention_forward.1} parent=87 // pred_check_branch
          %1209 = sbr.rel (%p1207) target = $region100
        $region99: #{self_sup_attention_forward.1} parent=87 // pred_region
          %s1210 = sand.u32 %s39, 1
          %s1211 = scalar_lea.sflag [#allocation15], %s1210
          %s1212 = sand.u32 %s257, 1
          %s1213 = smul.addr %s1212, 8
          %s1214 = scalar_lea.vmem [#allocation16], %s1213
          %1215 = dma.done %s1211, 128
        $region100: #{self_sup_attention_forward.1} parent=87 // pred_fallthru
          _
        // Predicated region
        $region101: #{self_sup_attention_forward.1} parent=87 // pred_check
          %p1216 = pneg %p300
        $region102: #{self_sup_attention_forward.1} parent=87 // pred_check_branch
          %1218 = sbr.rel (%p1216) target = $region104
        $region103: #{self_sup_attention_forward.1} parent=87 // pred_region
          %s1219 = sand.u32 %s285, 1
          %s1220 = scalar_lea.sflag [#allocation18], %s1219
          %s1221 = sand.u32 %s285, 1
          %s1222 = smul.addr %s1221, 8
          %s1223 = scalar_lea.vmem [#allocation17], %s1222
          %1224 = dma.done %s1220, 128
        $region104: #{self_sup_attention_forward.1} parent=87 // pred_fallthru
          _
      $region88: #{self_sup_attention_forward.1} parent=5 // pred_fallthru
        _
    $region6: #{self_sup_attention_forward.1} parent=1 // loop_footer
      %s37 = sadd.s32 1, %s33
    $region7: #{self_sup_attention_forward.1} parent=1 // loop_footer_branch
      %32 = sbr.rel target = $region3
    $region8: #{self_sup_attention_forward.1} parent=1 // loop_exit
      _
    %1225 = vsyncpa [#allocation3], 1
    %s1226 = scalar_lea.sflag [#allocation3], 1
    %1227 = vsyncpa %s1226, 1
    %1228 = vsyncpa [#allocation6], 1
    %s1229 = scalar_lea.sflag [#allocation6], 1
    %1230 = vsyncpa %s1229, 1
    %1231 = vsyncpa [#allocation9], 1
    %1232 = vsyncpa [#allocation12], 1
    %1233 = vsyncpa [#allocation4], 1
    %s1234 = scalar_lea.sflag [#allocation4], 1
    %1235 = vsyncpa %s1234, 1
    %1236 = vsyncpa [#allocation15], 1
    %s1237 = scalar_lea.sflag [#allocation15], 1
    %1238 = vsyncpa %s1237, 1
    %1239 = vsyncpa [#allocation18], 1
    %s1240 = scalar_lea.sflag [#allocation18], 1
    %1241 = vsyncpa %s1240, 1

</llo_original>
